<compile_context>
chip_gen: v5e
topology: v5e:2x2
jax: 0.10.0
libtpu: 0.0.40
codegen_flags: <defaults>
</compile_context>

<pallas_src>
import functools

import jax
import jax.numpy as jnp
from jax import lax
from jax.experimental import pallas as pl
from jax.experimental.pallas import tpu as pltpu


def basic_block_kernel(x_ref, w1_ref, w2_ref, bn_ref, mask_ref, o_ref,
                       xin_pad, mid_pad, col_ref, *, wdim):
    # x_ref   : (1, Cin,  H*W)            bf16  activation (also the identity)
    # w1_ref  : (Cout, 9*Cin)             bf16  conv1 taps packed along K
    # w2_ref  : (Cout, 9*Cout)            bf16  conv2 taps packed along K
    # bn_ref  : (Cout, 4)                 f32   columns [s1, b1, s2, b2]
    # mask_ref: (2, H*W)                  bf16  row0: w != 0, row1: w != W-1
    # o_ref   : (1, Cout, H*W)            bf16
    # xin_pad : (Cin,  H*W + 2*PADL)      bf16  lane-padded conv1 input
    # mid_pad : (Cout, H*W + 2*PADL)      bf16  lane-padded conv1->conv2 buffer
    # col_ref : (9*Cout, H*W)             bf16  im2col-lite scratch (K-packed RHS)
    c_in = x_ref.shape[1]
    c_out = o_ref.shape[1]
    npix = o_ref.shape[2]
    padl = (xin_pad.shape[1] - npix) // 2   # multiple of 128, >= W + 1
    assert c_in == c_out  # static; required by the residual add / shared masks

    # Re-zero only the (aligned) halo pads; interiors are fully overwritten
    # below, so this is safe under any megacore sharding of the batch axis.
    xin_pad[:, :padl] = jnp.zeros((c_in, padl), xin_pad.dtype)
    xin_pad[:, padl + npix:] = jnp.zeros((c_in, padl), xin_pad.dtype)
    mid_pad[:, :padl] = jnp.zeros((c_out, padl), mid_pad.dtype)
    mid_pad[:, padl + npix:] = jnp.zeros((c_out, padl), mid_pad.dtype)

    # Stage the bf16 input into the lane-padded scratch (lane-aligned write).
    x_bf = x_ref[0]
    xin_pad[:, padl:padl + npix] = x_bf

    # Column-validity masks, hoisted + broadcast ONCE (bf16, applied to the
    # MXU RHS while packing, never to the f32 result).
    m_first = jnp.broadcast_to(mask_ref[0:1, :], (c_in, npix))  # zero where w == 0
    m_last = jnp.broadcast_to(mask_ref[1:2, :], (c_in, npix))   # zero where w == W-1

    def build_cols(src_pad, c):
        # Pack the 9 lane-shifted (and column-masked) tap views along the
        # contraction dim -> one big MXU matmul per conv instead of 9 small
        # ones.  All slice starts are static; row offsets are multiples of c.
        for kh in range(3):
            for kw in range(3):
                t = kh * 3 + kw
                d = (kh - 1) * wdim + (kw - 1)
                patch = src_pad[:, padl + d:padl + d + npix]
                if kw == 0:
                    patch = patch * m_first
                elif kw == 2:
                    patch = patch * m_last
                col_ref[t * c:(t + 1) * c, :] = patch

    bn = bn_ref[...]                       # (Cout, 4) = [s1 | b1 | s2 | b2]

    # ---- conv1 (single MXU matmul, K = 9*Cin) + bn1 + relu ----
    build_cols(xin_pad, c_in)
    acc1 = jnp.dot(w1_ref[...], col_ref[...],
                   preferred_element_type=jnp.float32)
    y = jnp.maximum(acc1 * bn[:, 0:1] + bn[:, 1:2], 0.0)
    mid_pad[:, padl:padl + npix] = y.astype(mid_pad.dtype)

    # ---- conv2 (single MXU matmul, K = 9*Cout) + bn2 + identity + relu ----
    build_cols(mid_pad, c_out)
    acc2 = jnp.dot(w2_ref[...], col_ref[...],
                   preferred_element_type=jnp.float32)
    y2 = acc2 * bn[:, 2:3] + bn[:, 3:4] + x_bf.astype(jnp.float32)
    o_ref[0] = jnp.maximum(y2, 0.0).astype(o_ref.dtype)


def basic_block(x_nchw, w1, w2,
                gamma1, beta1, mean1, var1,
                gamma2, beta2, mean2, var2, eps=1e-5):
    """BasicBlock forward (stride=1, downsample=None, eval-mode BN). Returns bf16."""
    N, Cin, H, W = x_nchw.shape
    Cout, Cin_w, KH, KW = w1.shape
    assert (KH, KW) == (3, 3) and Cin_w == Cin, "conv1 must be 3x3 over Cin"
    assert w2.shape == (Cout, Cout, 3, 3), "conv2 must be 3x3 Cout->Cout"
    # Guard: stride != 1 / downsample are not implemented (module defaults).
    assert Cin == Cout, "residual add requires in_channels == out_channels when downsample is None"

    NPIX = H * W
    PADL = ((W + 1 + 127) // 128) * 128   # lane halo: >= W+1, 128-aligned

    # NCHW -> (N, C, H*W): pure reshape (no transpose); bf16 for the MXU.
    x2d = x_nchw.reshape(N, Cin, NPIX).astype(jnp.bfloat16)

    # OIHW -> (Cout, 9*Cin) tap matrix packed along the contraction dim.
    # Column (kh*3 + kw)*Cin + i holds w[:, i, kh, kw].
    w1_p = jnp.transpose(w1, (0, 2, 3, 1)).reshape(Cout, 9 * Cin).astype(jnp.bfloat16)
    w2_p = jnp.transpose(w2, (0, 2, 3, 1)).reshape(Cout, 9 * Cout).astype(jnp.bfloat16)

    # Fold BN (eval mode) into per-channel scale/bias, packed as one (Cout, 4).
    inv1 = gamma1 / jnp.sqrt(var1 + eps)
    inv2 = gamma2 / jnp.sqrt(var2 + eps)
    bn = jnp.stack([inv1, beta1 - mean1 * inv1,
                    inv2, beta2 - mean2 * inv2], axis=-1).astype(jnp.float32)

    # Column-validity masks for the +/-1-column taps (bf16: applied to the RHS).
    col_idx = jnp.arange(NPIX, dtype=jnp.int32) % W
    masks = jnp.stack([col_idx != 0, col_idx != (W - 1)],
                      axis=0).astype(jnp.bfloat16)

    kernel = functools.partial(basic_block_kernel, wdim=W)

    flops = 2 * N * NPIX * 9 * (Cin * Cout + Cout * Cout)
    bytes_accessed = (x2d.size * 2 + N * Cout * NPIX * 2
                      + w1_p.size * 2 + w2_p.size * 2
                      + bn.size * 4 + masks.size * 2)

    out2d = pl.pallas_call(
        kernel,
        out_shape=jax.ShapeDtypeStruct((N, Cout, NPIX), jnp.bfloat16),
        grid_spec=pltpu.PrefetchScalarGridSpec(
            num_scalar_prefetch=0,
            grid=(N,),
            in_specs=[
                pl.BlockSpec((1, Cin, NPIX), lambda b: (b, 0, 0)),
                pl.BlockSpec((Cout, 9 * Cin), lambda b: (0, 0)),
                pl.BlockSpec((Cout, 9 * Cout), lambda b: (0, 0)),
                pl.BlockSpec((Cout, 4), lambda b: (0, 0)),
                pl.BlockSpec((2, NPIX), lambda b: (0, 0)),
            ],
            out_specs=pl.BlockSpec((1, Cout, NPIX), lambda b: (b, 0, 0)),
            scratch_shapes=[
                pltpu.VMEM((Cin, NPIX + 2 * PADL), jnp.bfloat16),   # xin_pad
                pltpu.VMEM((Cout, NPIX + 2 * PADL), jnp.bfloat16),  # mid_pad
                pltpu.VMEM((9 * Cout, NPIX), jnp.bfloat16),         # im2col-lite
            ],
        ),
        compiler_params=pltpu.CompilerParams(dimension_semantics=("parallel",)),
        cost_estimate=pl.CostEstimate(flops=flops, transcendentals=0,
                                      bytes_accessed=bytes_accessed),
    )(x2d, w1_p, w2_p, bn, masks)

    return out2d.reshape(N, Cout, H, W)   # back to NCHW: pure reshape


def _reference(x, w1, w2, g1, be1, m1, v1, g2, be2, m2, v2, eps=1e-5):
    """Pure-JAX f32 reference (eval-mode BN) for correctness check."""
    dn = ('NCHW', 'OIHW', 'NCHW')
    def bn(y, g, b, m, v):
        inv = g / jnp.sqrt(v + eps)
        return y * inv[None, :, None, None] + (b - m * inv)[None, :, None, None]
    out = lax.conv_general_dilated(x, w1, (1, 1), 'SAME', dimension_numbers=dn)
    out = jnp.maximum(bn(out, g1, be1, m1, v1), 0.0)
    out = lax.conv_general_dilated(out, w2, (1, 1), 'SAME', dimension_numbers=dn)
    out = bn(out, g2, be2, m2, v2) + x
    return jnp.maximum(out, 0.0)


if __name__ == "__main__":
    key = jax.random.PRNGKey(0)
    ks = jax.random.split(key, 8)

    # channels kept a multiple of 16 (bf16 sublane pack) per perf review.
    N, C, H, W = 2, 16, 16, 16          # in_ch == out_ch, stride=1, downsample=None
    x = jax.random.normal(ks[0], (N, C, H, W), jnp.float32)
    w1 = 0.1 * jax.random.normal(ks[1], (C, C, 3, 3), jnp.float32)
    w2 = 0.1 * jax.random.normal(ks[2], (C, C, 3, 3), jnp.float32)

    gamma1 = 1.0 + 0.1 * jax.random.normal(ks[3], (C,), jnp.float32)
    beta1 = 0.1 * jax.random.normal(ks[4], (C,), jnp.float32)
    mean1 = 0.05 * jax.random.normal(ks[5], (C,), jnp.float32)
    var1 = 1.0 + 0.1 * jnp.abs(jax.random.normal(ks[6], (C,), jnp.float32))

    gamma2 = 1.0 + 0.05 * jax.random.normal(ks[7], (C,), jnp.float32)
    beta2 = jnp.linspace(-0.1, 0.1, C, dtype=jnp.float32)
    mean2 = jnp.linspace(-0.05, 0.05, C, dtype=jnp.float32)
    var2 = 1.0 + jnp.linspace(0.0, 0.2, C, dtype=jnp.float32)

    out = basic_block(x, w1, w2, gamma1, beta1, mean1, var1,
                      gamma2, beta2, mean2, var2)
    out = jax.block_until_ready(out)

    ref = _reference(x, w1, w2, gamma1, beta1, mean1, var1,
                     gamma2, beta2, mean2, var2)
    assert out.shape == (N, C, H, W)
    # bf16 matmul inputs / bf16 identity / bf16 output vs f32 reference.
    assert jnp.allclose(out.astype(jnp.float32), ref, atol=3e-2, rtol=3e-2), \
        "mismatch vs JAX reference"

    print("KERNEL_OK")
</pallas_src>

<mosaic_0001>
module attributes {stable_mosaic.version = 11 : i64} {
  func.func @basic_block_kernel(%arg0: i32, %arg1: memref<1x16x256xbf16, #tpu.memory_space<vmem>>, %arg2: memref<16x144xbf16, #tpu.memory_space<vmem>>, %arg3: memref<16x144xbf16, #tpu.memory_space<vmem>>, %arg4: memref<16x4xf32, #tpu.memory_space<vmem>>, %arg5: memref<2x256xbf16, #tpu.memory_space<vmem>>, %arg6: memref<1x16x256xbf16, #tpu.memory_space<vmem>>, %arg7: memref<16x512xbf16, #tpu.memory_space<vmem>>, %arg8: memref<16x512xbf16, #tpu.memory_space<vmem>>, %arg9: memref<144x256xbf16, #tpu.memory_space<vmem>>) attributes {dimension_semantics = [#tpu.dimension_semantics<parallel>], iteration_bounds = array<i64: 2>, scalar_prefetch = 0 : i64, scratch_operands = 3 : i64, tpu.core_type = #tpu.core_type<tc>, window_params = [{transform_indices = @transform_0, window_bounds = array<i64: 1, 16, 256>}, {pipeline_mode = #tpu.pipeline_mode<synchronous>, transform_indices = @transform_1, window_bounds = array<i64: 16, 144>}, {pipeline_mode = #tpu.pipeline_mode<synchronous>, transform_indices = @transform_2, window_bounds = array<i64: 16, 144>}, {pipeline_mode = #tpu.pipeline_mode<synchronous>, transform_indices = @transform_3, window_bounds = array<i64: 16, 4>}, {pipeline_mode = #tpu.pipeline_mode<synchronous>, transform_indices = @transform_4, window_bounds = array<i64: 2, 256>}, {transform_indices = @transform_5, window_bounds = array<i64: 1, 16, 256>}]} {
    %cst = arith.constant 0.000000e+00 : bf16
    %0 = vector.broadcast %cst : bf16 to vector<16x128xbf16>
    %c0 = arith.constant 0 : index
    %c0_0 = arith.constant 0 : index
    %1 = vector.load %arg7[%c0, %c0_0] : memref<16x512xbf16, #tpu.memory_space<vmem>>, vector<16x128xbf16>
    tpu.vector_store %arg7[%c0, %c0_0], %0 {strides = array<i32>} : memref<16x512xbf16, #tpu.memory_space<vmem>>, vector<16x128xbf16>,
    %cst_1 = arith.constant 0.000000e+00 : bf16
    %2 = vector.broadcast %cst_1 : bf16 to vector<16x128xbf16>
    %c0_2 = arith.constant 0 : index
    %c384 = arith.constant 384 : index
    %3 = vector.load %arg7[%c0_2, %c384] : memref<16x512xbf16, #tpu.memory_space<vmem>>, vector<16x128xbf16>
    tpu.vector_store %arg7[%c0_2, %c384], %2 {strides = array<i32>} : memref<16x512xbf16, #tpu.memory_space<vmem>>, vector<16x128xbf16>,
    %cst_3 = arith.constant 0.000000e+00 : bf16
    %4 = vector.broadcast %cst_3 : bf16 to vector<16x128xbf16>
    %c0_4 = arith.constant 0 : index
    %c0_5 = arith.constant 0 : index
    %5 = vector.load %arg8[%c0_4, %c0_5] : memref<16x512xbf16, #tpu.memory_space<vmem>>, vector<16x128xbf16>
    tpu.vector_store %arg8[%c0_4, %c0_5], %4 {strides = array<i32>} : memref<16x512xbf16, #tpu.memory_space<vmem>>, vector<16x128xbf16>,
    %cst_6 = arith.constant 0.000000e+00 : bf16
    %6 = vector.broadcast %cst_6 : bf16 to vector<16x128xbf16>
    %c0_7 = arith.constant 0 : index
    %c384_8 = arith.constant 384 : index
    %7 = vector.load %arg8[%c0_7, %c384_8] : memref<16x512xbf16, #tpu.memory_space<vmem>>, vector<16x128xbf16>
    tpu.vector_store %arg8[%c0_7, %c384_8], %6 {strides = array<i32>} : memref<16x512xbf16, #tpu.memory_space<vmem>>, vector<16x128xbf16>,
    %c0_9 = arith.constant 0 : index
    %c0_10 = arith.constant 0 : index
    %c0_11 = arith.constant 0 : index
    %8 = vector.load %arg1[%c0_9, %c0_10, %c0_11] : memref<1x16x256xbf16, #tpu.memory_space<vmem>>, vector<1x16x256xbf16>
    %9 = vector.shape_cast %8 : vector<1x16x256xbf16> to vector<16x256xbf16>
    %c0_12 = arith.constant 0 : index
    %c128 = arith.constant 128 : index
    %10 = vector.load %arg7[%c0_12, %c128] : memref<16x512xbf16, #tpu.memory_space<vmem>>, vector<16x256xbf16>
    tpu.vector_store %arg7[%c0_12, %c128], %9 {strides = array<i32>} : memref<16x512xbf16, #tpu.memory_space<vmem>>, vector<16x256xbf16>,
    %c0_13 = arith.constant 0 : index
    %c0_14 = arith.constant 0 : index
    %11 = vector.load %arg5[%c0_13, %c0_14] : memref<2x256xbf16, #tpu.memory_space<vmem>>, vector<1x256xbf16>
    %12 = vector.shape_cast %11 : vector<1x256xbf16> to vector<1x256xbf16>
    %13 = vector.broadcast %12 : vector<1x256xbf16> to vector<16x256xbf16>
    %c1 = arith.constant 1 : index
    %c0_15 = arith.constant 0 : index
    %14 = vector.load %arg5[%c1, %c0_15] : memref<2x256xbf16, #tpu.memory_space<vmem>>, vector<1x256xbf16>
    %15 = vector.shape_cast %14 : vector<1x256xbf16> to vector<1x256xbf16>
    %16 = vector.broadcast %15 : vector<1x256xbf16> to vector<16x256xbf16>
    %c0_16 = arith.constant 0 : index
    %c0_17 = arith.constant 0 : index
    %17 = vector.load %arg4[%c0_16, %c0_17] : memref<16x4xf32, #tpu.memory_space<vmem>>, vector<16x4xf32>
    %c0_18 = arith.constant 0 : index
    %c111 = arith.constant 111 : index
    %18 = vector.load %arg7[%c0_18, %c111] : memref<16x512xbf16, #tpu.memory_space<vmem>>, vector<16x256xbf16>
    %19 = arith.mulf %18, %13 : vector<16x256xbf16>
    %c0_19 = arith.constant 0 : index
    %c0_20 = arith.constant 0 : index
    %20 = vector.load %arg9[%c0_19, %c0_20] : memref<144x256xbf16, #tpu.memory_space<vmem>>, vector<16x256xbf16>
    tpu.vector_store %arg9[%c0_19, %c0_20], %19 {strides = array<i32>} : memref<144x256xbf16, #tpu.memory_space<vmem>>, vector<16x256xbf16>,
    %c0_21 = arith.constant 0 : index
    %c112 = arith.constant 112 : index
    %21 = vector.load %arg7[%c0_21, %c112] : memref<16x512xbf16, #tpu.memory_space<vmem>>, vector<16x256xbf16>
    %c16 = arith.constant 16 : index
    %c0_22 = arith.constant 0 : index
    %22 = vector.load %arg9[%c16, %c0_22] : memref<144x256xbf16, #tpu.memory_space<vmem>>, vector<16x256xbf16>
    tpu.vector_store %arg9[%c16, %c0_22], %21 {strides = array<i32>} : memref<144x256xbf16, #tpu.memory_space<vmem>>, vector<16x256xbf16>,
    %c0_23 = arith.constant 0 : index
    %c113 = arith.constant 113 : index
    %23 = vector.load %arg7[%c0_23, %c113] : memref<16x512xbf16, #tpu.memory_space<vmem>>, vector<16x256xbf16>
    %24 = arith.mulf %23, %16 : vector<16x256xbf16>
    %c32 = arith.constant 32 : index
    %c0_24 = arith.constant 0 : index
    %25 = vector.load %arg9[%c32, %c0_24] : memref<144x256xbf16, #tpu.memory_space<vmem>>, vector<16x256xbf16>
    tpu.vector_store %arg9[%c32, %c0_24], %24 {strides = array<i32>} : memref<144x256xbf16, #tpu.memory_space<vmem>>, vector<16x256xbf16>,
    %c0_25 = arith.constant 0 : index
    %c127 = arith.constant 127 : index
    %26 = vector.load %arg7[%c0_25, %c127] : memref<16x512xbf16, #tpu.memory_space<vmem>>, vector<16x256xbf16>
    %27 = arith.mulf %26, %13 : vector<16x256xbf16>
    %c48 = arith.constant 48 : index
    %c0_26 = arith.constant 0 : index
    %28 = vector.load %arg9[%c48, %c0_26] : memref<144x256xbf16, #tpu.memory_space<vmem>>, vector<16x256xbf16>
    tpu.vector_store %arg9[%c48, %c0_26], %27 {strides = array<i32>} : memref<144x256xbf16, #tpu.memory_space<vmem>>, vector<16x256xbf16>,
    %c0_27 = arith.constant 0 : index
    %c128_28 = arith.constant 128 : index
    %29 = vector.load %arg7[%c0_27, %c128_28] : memref<16x512xbf16, #tpu.memory_space<vmem>>, vector<16x256xbf16>
    %c64 = arith.constant 64 : index
    %c0_29 = arith.constant 0 : index
    %30 = vector.load %arg9[%c64, %c0_29] : memref<144x256xbf16, #tpu.memory_space<vmem>>, vector<16x256xbf16>
    tpu.vector_store %arg9[%c64, %c0_29], %29 {strides = array<i32>} : memref<144x256xbf16, #tpu.memory_space<vmem>>, vector<16x256xbf16>,
    %c0_30 = arith.constant 0 : index
    %c129 = arith.constant 129 : index
    %31 = vector.load %arg7[%c0_30, %c129] : memref<16x512xbf16, #tpu.memory_space<vmem>>, vector<16x256xbf16>
    %32 = arith.mulf %31, %16 : vector<16x256xbf16>
    %c80 = arith.constant 80 : index
    %c0_31 = arith.constant 0 : index
    %33 = vector.load %arg9[%c80, %c0_31] : memref<144x256xbf16, #tpu.memory_space<vmem>>, vector<16x256xbf16>
    tpu.vector_store %arg9[%c80, %c0_31], %32 {strides = array<i32>} : memref<144x256xbf16, #tpu.memory_space<vmem>>, vector<16x256xbf16>,
    %c0_32 = arith.constant 0 : index
    %c143 = arith.constant 143 : index
    %34 = vector.load %arg7[%c0_32, %c143] : memref<16x512xbf16, #tpu.memory_space<vmem>>, vector<16x256xbf16>
    %35 = arith.mulf %34, %13 : vector<16x256xbf16>
    %c96 = arith.constant 96 : index
    %c0_33 = arith.constant 0 : index
    %36 = vector.load %arg9[%c96, %c0_33] : memref<144x256xbf16, #tpu.memory_space<vmem>>, vector<16x256xbf16>
    tpu.vector_store %arg9[%c96, %c0_33], %35 {strides = array<i32>} : memref<144x256xbf16, #tpu.memory_space<vmem>>, vector<16x256xbf16>,
    %c0_34 = arith.constant 0 : index
    %c144 = arith.constant 144 : index
    %37 = vector.load %arg7[%c0_34, %c144] : memref<16x512xbf16, #tpu.memory_space<vmem>>, vector<16x256xbf16>
    %c112_35 = arith.constant 112 : index
    %c0_36 = arith.constant 0 : index
    %38 = vector.load %arg9[%c112_35, %c0_36] : memref<144x256xbf16, #tpu.memory_space<vmem>>, vector<16x256xbf16>
    tpu.vector_store %arg9[%c112_35, %c0_36], %37 {strides = array<i32>} : memref<144x256xbf16, #tpu.memory_space<vmem>>, vector<16x256xbf16>,
    %c0_37 = arith.constant 0 : index
    %c145 = arith.constant 145 : index
    %39 = vector.load %arg7[%c0_37, %c145] : memref<16x512xbf16, #tpu.memory_space<vmem>>, vector<16x256xbf16>
    %40 = arith.mulf %39, %16 : vector<16x256xbf16>
    %c128_38 = arith.constant 128 : index
    %c0_39 = arith.constant 0 : index
    %41 = vector.load %arg9[%c128_38, %c0_39] : memref<144x256xbf16, #tpu.memory_space<vmem>>, vector<16x256xbf16>
    tpu.vector_store %arg9[%c128_38, %c0_39], %40 {strides = array<i32>} : memref<144x256xbf16, #tpu.memory_space<vmem>>, vector<16x256xbf16>,
    %c0_40 = arith.constant 0 : index
    %c0_41 = arith.constant 0 : index
    %42 = vector.load %arg2[%c0_40, %c0_41] : memref<16x144xbf16, #tpu.memory_space<vmem>>, vector<16x144xbf16>
    %c0_42 = arith.constant 0 : index
    %c0_43 = arith.constant 0 : index
    %43 = vector.load %arg9[%c0_42, %c0_43] : memref<144x256xbf16, #tpu.memory_space<vmem>>, vector<144x256xbf16>
    %cst_44 = arith.constant dense<0.000000e+00> : vector<16x256xf32>
    %44 = tpu.matmul %42, %43, %cst_44 {dimension_numbers = #tpu.dot_dimension_numbers<[1], [0], [0], [1], [0, 0, 1, 1], [], []>} : vector<16x144xbf16>, vector<144x256xbf16>, vector<16x256xf32> -> vector<16x256xf32>
    %45 = vector.extract_strided_slice %17 {offsets = [0, 0], sizes = [16, 1], strides = [1, 1]} : vector<16x4xf32> to vector<16x1xf32>
    %46 = vector.broadcast %45 : vector<16x1xf32> to vector<16x256xf32>
    %47 = arith.mulf %44, %46 : vector<16x256xf32>
    %48 = vector.extract_strided_slice %17 {offsets = [0, 1], sizes = [16, 1], strides = [1, 1]} : vector<16x4xf32> to vector<16x1xf32>
    %49 = vector.broadcast %48 : vector<16x1xf32> to vector<16x256xf32>
    %50 = arith.addf %47, %49 : vector<16x256xf32>
    %cst_45 = arith.constant 0.000000e+00 : f32
    %51 = vector.broadcast %cst_45 : f32 to vector<16x256xf32>
    %52 = arith.maximumf %50, %51 : vector<16x256xf32>
    %53 = arith.truncf %52 : vector<16x256xf32> to vector<16x256xbf16>
    %c0_46 = arith.constant 0 : index
    %c128_47 = arith.constant 128 : index
    %54 = vector.load %arg8[%c0_46, %c128_47] : memref<16x512xbf16, #tpu.memory_space<vmem>>, vector<16x256xbf16>
    tpu.vector_store %arg8[%c0_46, %c128_47], %53 {strides = array<i32>} : memref<16x512xbf16, #tpu.memory_space<vmem>>, vector<16x256xbf16>,
    %c0_48 = arith.constant 0 : index
    %c111_49 = arith.constant 111 : index
    %55 = vector.load %arg8[%c0_48, %c111_49] : memref<16x512xbf16, #tpu.memory_space<vmem>>, vector<16x256xbf16>
    %56 = arith.mulf %55, %13 : vector<16x256xbf16>
    %c0_50 = arith.constant 0 : index
    %c0_51 = arith.constant 0 : index
    %57 = vector.load %arg9[%c0_50, %c0_51] : memref<144x256xbf16, #tpu.memory_space<vmem>>, vector<16x256xbf16>
    tpu.vector_store %arg9[%c0_50, %c0_51], %56 {strides = array<i32>} : memref<144x256xbf16, #tpu.memory_space<vmem>>, vector<16x256xbf16>,
    %c0_52 = arith.constant 0 : index
    %c112_53 = arith.constant 112 : index
    %58 = vector.load %arg8[%c0_52, %c112_53] : memref<16x512xbf16, #tpu.memory_space<vmem>>, vector<16x256xbf16>
    %c16_54 = arith.constant 16 : index
    %c0_55 = arith.constant 0 : index
    %59 = vector.load %arg9[%c16_54, %c0_55] : memref<144x256xbf16, #tpu.memory_space<vmem>>, vector<16x256xbf16>
    tpu.vector_store %arg9[%c16_54, %c0_55], %58 {strides = array<i32>} : memref<144x256xbf16, #tpu.memory_space<vmem>>, vector<16x256xbf16>,
    %c0_56 = arith.constant 0 : index
    %c113_57 = arith.constant 113 : index
    %60 = vector.load %arg8[%c0_56, %c113_57] : memref<16x512xbf16, #tpu.memory_space<vmem>>, vector<16x256xbf16>
    %61 = arith.mulf %60, %16 : vector<16x256xbf16>
    %c32_58 = arith.constant 32 : index
    %c0_59 = arith.constant 0 : index
    %62 = vector.load %arg9[%c32_58, %c0_59] : memref<144x256xbf16, #tpu.memory_space<vmem>>, vector<16x256xbf16>
    tpu.vector_store %arg9[%c32_58, %c0_59], %61 {strides = array<i32>} : memref<144x256xbf16, #tpu.memory_space<vmem>>, vector<16x256xbf16>,
    %c0_60 = arith.constant 0 : index
    %c127_61 = arith.constant 127 : index
    %63 = vector.load %arg8[%c0_60, %c127_61] : memref<16x512xbf16, #tpu.memory_space<vmem>>, vector<16x256xbf16>
    %64 = arith.mulf %63, %13 : vector<16x256xbf16>
    %c48_62 = arith.constant 48 : index
    %c0_63 = arith.constant 0 : index
    %65 = vector.load %arg9[%c48_62, %c0_63] : memref<144x256xbf16, #tpu.memory_space<vmem>>, vector<16x256xbf16>
    tpu.vector_store %arg9[%c48_62, %c0_63], %64 {strides = array<i32>} : memref<144x256xbf16, #tpu.memory_space<vmem>>, vector<16x256xbf16>,
    %c0_64 = arith.constant 0 : index
    %c128_65 = arith.constant 128 : index
    %66 = vector.load %arg8[%c0_64, %c128_65] : memref<16x512xbf16, #tpu.memory_space<vmem>>, vector<16x256xbf16>
    %c64_66 = arith.constant 64 : index
    %c0_67 = arith.constant 0 : index
    %67 = vector.load %arg9[%c64_66, %c0_67] : memref<144x256xbf16, #tpu.memory_space<vmem>>, vector<16x256xbf16>
    tpu.vector_store %arg9[%c64_66, %c0_67], %66 {strides = array<i32>} : memref<144x256xbf16, #tpu.memory_space<vmem>>, vector<16x256xbf16>,
    %c0_68 = arith.constant 0 : index
    %c129_69 = arith.constant 129 : index
    %68 = vector.load %arg8[%c0_68, %c129_69] : memref<16x512xbf16, #tpu.memory_space<vmem>>, vector<16x256xbf16>
    %69 = arith.mulf %68, %16 : vector<16x256xbf16>
    %c80_70 = arith.constant 80 : index
    %c0_71 = arith.constant 0 : index
    %70 = vector.load %arg9[%c80_70, %c0_71] : memref<144x256xbf16, #tpu.memory_space<vmem>>, vector<16x256xbf16>
    tpu.vector_store %arg9[%c80_70, %c0_71], %69 {strides = array<i32>} : memref<144x256xbf16, #tpu.memory_space<vmem>>, vector<16x256xbf16>,
    %c0_72 = arith.constant 0 : index
    %c143_73 = arith.constant 143 : index
    %71 = vector.load %arg8[%c0_72, %c143_73] : memref<16x512xbf16, #tpu.memory_space<vmem>>, vector<16x256xbf16>
    %72 = arith.mulf %71, %13 : vector<16x256xbf16>
    %c96_74 = arith.constant 96 : index
    %c0_75 = arith.constant 0 : index
    %73 = vector.load %arg9[%c96_74, %c0_75] : memref<144x256xbf16, #tpu.memory_space<vmem>>, vector<16x256xbf16>
    tpu.vector_store %arg9[%c96_74, %c0_75], %72 {strides = array<i32>} : memref<144x256xbf16, #tpu.memory_space<vmem>>, vector<16x256xbf16>,
    %c0_76 = arith.constant 0 : index
    %c144_77 = arith.constant 144 : index
    %74 = vector.load %arg8[%c0_76, %c144_77] : memref<16x512xbf16, #tpu.memory_space<vmem>>, vector<16x256xbf16>
    %c112_78 = arith.constant 112 : index
    %c0_79 = arith.constant 0 : index
    %75 = vector.load %arg9[%c112_78, %c0_79] : memref<144x256xbf16, #tpu.memory_space<vmem>>, vector<16x256xbf16>
    tpu.vector_store %arg9[%c112_78, %c0_79], %74 {strides = array<i32>} : memref<144x256xbf16, #tpu.memory_space<vmem>>, vector<16x256xbf16>,
    %c0_80 = arith.constant 0 : index
    %c145_81 = arith.constant 145 : index
    %76 = vector.load %arg8[%c0_80, %c145_81] : memref<16x512xbf16, #tpu.memory_space<vmem>>, vector<16x256xbf16>
    %77 = arith.mulf %76, %16 : vector<16x256xbf16>
    %c128_82 = arith.constant 128 : index
    %c0_83 = arith.constant 0 : index
    %78 = vector.load %arg9[%c128_82, %c0_83] : memref<144x256xbf16, #tpu.memory_space<vmem>>, vector<16x256xbf16>
    tpu.vector_store %arg9[%c128_82, %c0_83], %77 {strides = array<i32>} : memref<144x256xbf16, #tpu.memory_space<vmem>>, vector<16x256xbf16>,
    %c0_84 = arith.constant 0 : index
    %c0_85 = arith.constant 0 : index
    %79 = vector.load %arg3[%c0_84, %c0_85] : memref<16x144xbf16, #tpu.memory_space<vmem>>, vector<16x144xbf16>
    %c0_86 = arith.constant 0 : index
    %c0_87 = arith.constant 0 : index
    %80 = vector.load %arg9[%c0_86, %c0_87] : memref<144x256xbf16, #tpu.memory_space<vmem>>, vector<144x256xbf16>
    %cst_88 = arith.constant dense<0.000000e+00> : vector<16x256xf32>
    %81 = tpu.matmul %79, %80, %cst_88 {dimension_numbers = #tpu.dot_dimension_numbers<[1], [0], [0], [1], [0, 0, 1, 1], [], []>} : vector<16x144xbf16>, vector<144x256xbf16>, vector<16x256xf32> -> vector<16x256xf32>
    %82 = vector.extract_strided_slice %17 {offsets = [0, 2], sizes = [16, 1], strides = [1, 1]} : vector<16x4xf32> to vector<16x1xf32>
    %83 = vector.broadcast %82 : vector<16x1xf32> to vector<16x256xf32>
    %84 = arith.mulf %81, %83 : vector<16x256xf32>
    %85 = vector.extract_strided_slice %17 {offsets = [0, 3], sizes = [16, 1], strides = [1, 1]} : vector<16x4xf32> to vector<16x1xf32>
    %86 = vector.broadcast %85 : vector<16x1xf32> to vector<16x256xf32>
    %87 = arith.addf %84, %86 : vector<16x256xf32>
    %88 = arith.extf %9 : vector<16x256xbf16> to vector<16x256xf32>
    %89 = arith.addf %87, %88 : vector<16x256xf32>
    %cst_89 = arith.constant 0.000000e+00 : f32
    %90 = vector.broadcast %cst_89 : f32 to vector<16x256xf32>
    %91 = arith.maximumf %89, %90 : vector<16x256xf32>
    %92 = arith.truncf %91 : vector<16x256xf32> to vector<16x256xbf16>
    %c0_90 = arith.constant 0 : index
    %c0_91 = arith.constant 0 : index
    %c0_92 = arith.constant 0 : index
    %93 = vector.load %arg6[%c0_90, %c0_91, %c0_92] : memref<1x16x256xbf16, #tpu.memory_space<vmem>>, vector<1x16x256xbf16>
    %94 = vector.shape_cast %93 : vector<1x16x256xbf16> to vector<16x256xbf16>
    %95 = vector.shape_cast %92 : vector<16x256xbf16> to vector<1x16x256xbf16>
    tpu.vector_store %arg6[%c0_90, %c0_91, %c0_92], %95 {strides = array<i32>} : memref<1x16x256xbf16, #tpu.memory_space<vmem>>, vector<1x16x256xbf16>,
    return
  }
  func.func @transform_0(%arg0: i32) -> (i32, i32, i32) {
    %c0_i32 = arith.constant 0 : i32
    %c0_i32_0 = arith.constant 0 : i32
    %c0_i32_1 = arith.constant 0 : i32
    return %arg0, %c0_i32, %c0_i32_0 : i32, i32, i32
  }
  func.func @transform_1(%arg0: i32) -> (i32, i32) {
    %c0_i32 = arith.constant 0 : i32
    %c0_i32_0 = arith.constant 0 : i32
    %c0_i32_1 = arith.constant 0 : i32
    return %c0_i32, %c0_i32_0 : i32, i32
  }
  func.func @transform_2(%arg0: i32) -> (i32, i32) {
    %c0_i32 = arith.constant 0 : i32
    %c0_i32_0 = arith.constant 0 : i32
    %c0_i32_1 = arith.constant 0 : i32
    return %c0_i32, %c0_i32_0 : i32, i32
  }
  func.func @transform_3(%arg0: i32) -> (i32, i32) {
    %c0_i32 = arith.constant 0 : i32
    %c0_i32_0 = arith.constant 0 : i32
    %c0_i32_1 = arith.constant 0 : i32
    return %c0_i32, %c0_i32_0 : i32, i32
  }
  func.func @transform_4(%arg0: i32) -> (i32, i32) {
    %c0_i32 = arith.constant 0 : i32
    %c0_i32_0 = arith.constant 0 : i32
    %c0_i32_1 = arith.constant 0 : i32
    return %c0_i32, %c0_i32_0 : i32, i32
  }
  func.func @transform_5(%arg0: i32) -> (i32, i32, i32) {
    %c0_i32 = arith.constant 0 : i32
    %c0_i32_0 = arith.constant 0 : i32
    %c0_i32_1 = arith.constant 0 : i32
    return %arg0, %c0_i32, %c0_i32_0 : i32, i32, i32
  }
}

</mosaic_0001>

<llo_original>
// kernel: tpu_custom_call.1
$region0: #{tpu_custom_call.1}
  #allocation0 [shape = 'u32[]', space=smem, size = 0x4, offset = 0x4, fixed_abs, tag = 'smem constant byte address 0x4 - core index']
  #allocation1 [shape = 'u32[72,128]{1,0:T(1,128)}', space=vmem, size = 0x9000, scoped, tag = 'internal scratch']
  #allocation2 [shape = 'bf16[16,512]{1,0:T(8,128)(2,1)}', space=vmem, size = 0x4000, scoped, tag = 'scratch operand']
  #allocation3 [shape = 'bf16[16,512]{1,0:T(8,128)(2,1)}', space=vmem, size = 0x4000, scoped, tag = 'scratch operand']
  #allocation4 [shape = 'bf16[144,256]{1,0:T(8,128)(2,1)}', space=vmem, size = 0x12000, scoped, tag = 'scratch operand']
  %s0 = inlined_call_operand.hbm [shape: bf16[2,16,256], index: 0, kind: input, shape index: {}]
  %s1 = inlined_call_operand.vmem [shape: bf16[16,144], index: 1, kind: input, shape index: {}]
  %s2 = inlined_call_operand.hbm [shape: bf16[16,144], index: 2, kind: input, shape index: {}]
  %s3 = inlined_call_operand.vmem [shape: f32[16,4], index: 3, kind: input, shape index: {}]
  %s4 = inlined_call_operand.vmem [shape: bf16[2,256], index: 4, kind: input, shape index: {}]
  %s5 = inlined_call_operand.hbm [shape: bf16[2,16,256], index: 5, kind: output, shape index: {}]
  %s6 = sld [smem:[#allocation0]]
  $region61: #{tpu_custom_call.1} parent=0
    _
  %s8 = ssub.s32 1, %s6
  %s9 = scalar_select 0, %s8, %s6
  $region1: #{tpu_custom_call.1} parent=0
    #allocation5 [shape = 'u8[16384]{0}', space=vmem, size = 0x4000, scoped, tag = 'input window, operand 0']
    #allocation6 [shape = 's32[2]{0}', space=sflag, size = 0x8, scoped, tag = 'scoped memory for tpu_custom_call.1']
    #allocation7 [shape = 's32[2]{0}', space=sflag, size = 0x8, scoped, tag = 'scoped memory for tpu_custom_call.1']
    #allocation8 [shape = 'u8[8192]{0}', space=vmem, size = 0x2000, scoped, tag = 'input window, operand 2, single buffered']
    #allocation9 [shape = 's32[1]{0}', space=sflag, size = 0x4, scoped, tag = 'scoped memory for tpu_custom_call.1']
    #allocation10 [shape = 'u8[16384]{0}', space=vmem, size = 0x4000, scoped, tag = 'output window, operand 0']
    %10 = vsyncpa [#allocation6], 0
    %s11 = scalar_lea.sflag [#allocation6], 1
    %12 = vsyncpa %s11, 0
    %13 = vsyncpa [#allocation9], 0
    %14 = vsyncpa [#allocation7], 0
    %s15 = scalar_lea.sflag [#allocation7], 1
    %16 = vsyncpa %s15, 0
    loop: start=0, step=1, limit=4
    $region2: #{tpu_custom_call.1} parent=1 // loop_pre_header
      _
    $region3: #{tpu_custom_call.1} parent=1 // loop_header
      %s18 = sphi 0, %s22
      %p19 = scmp.ge.s32.totalorder %s18, 4
      %s28 = sphi 0, %s30
      %s31 = sphi 0, %s28
      %s32 = sphi 0, %s31
      %s48 = sphi 0, %s32
      %s52 = sphi 0, %s52
      %s54 = sphi 0, %s52
      %s55 = sphi 0, %s54
      %s69 = sphi 0, %s55
      %s73 = sphi 0, %s73
      %s75 = sphi 0, %s73
      %s76 = sphi 0, %s75
      %s90 = sphi 0, %s76
      %s94 = sphi 0, %s94
      %s96 = sphi 0, %s94
      %s97 = sphi 0, %s96
      %s111 = sphi 0, %s97
      %s115 = sphi 0, %s115
      %s117 = sphi 0, %s115
      %s118 = sphi 0, %s117
      %s132 = sphi 0, %s118
      %s138 = sphi 0, %s140
      %s141 = sphi 0, %s138
      %s142 = sphi 0, %s141
      %s158 = sphi 0, %s142
    $region4: #{tpu_custom_call.1} parent=1 // loop_header_branch
      %21 = sbr.rel (%p19) target = $region8
    $region5: #{tpu_custom_call.1} parent=1 // loop_body
      %s23 = ssub.s32 %s18, 1
      %s24 = ssub.s32 %s18, 2
      %s25 = sadd.s32 %s18, 1
      %s26 = ssub.s32 %s18, %s25
      %p27 = scmp.eq.s32.totalorder %s26, 0
      %s29 = sadd.s32 %s28, 1
      %s30 = scalar_select %p27, %s28, %s29
      %p33 = pneg %p27
      %p34 = scmp.eq.s32.totalorder %s18, 1
      %p35 = por %p33, %p34
      %p36 = scmp.ne.s32.totalorder %s28, %s31
      %p37 = scmp.eq.s32.totalorder %s18, 0
      %p38 = por %p36, %p37
      %p39 = scmp.ne.s32.totalorder %s28, %s31
      %p40 = scmp.eq.s32.totalorder %s23, 1
      %p41 = por %p39, %p40
      %p42 = scmp.ne.s32.totalorder %s31, %s32
      %p43 = scmp.eq.s32.totalorder %s23, 0
      %p44 = por %p42, %p43
      %p45 = scmp.ne.s32.totalorder %s31, %s32
      %p46 = scmp.eq.s32.totalorder %s24, 1
      %p47 = por %p45, %p46
      %p49 = scmp.ne.s32.totalorder %s32, %s48
      %p50 = scmp.eq.s32.totalorder %s24, 0
      %p51 = por %p49, %p50
      %s53 = sadd.s32 %s52, 1
      %p56 = scmp.eq.s32.totalorder %s18, 1
      %p57 = scmp.ne.s32.totalorder %s52, %s54
      %p58 = scmp.eq.s32.totalorder %s18, 0
      %p59 = por %p57, %p58
      %p60 = scmp.ne.s32.totalorder %s52, %s54
      %p61 = scmp.eq.s32.totalorder %s23, 1
      %p62 = por %p60, %p61
      %p63 = scmp.ne.s32.totalorder %s54, %s55
      %p64 = scmp.eq.s32.totalorder %s23, 0
      %p65 = por %p63, %p64
      %p66 = scmp.ne.s32.totalorder %s54, %s55
      %p67 = scmp.eq.s32.totalorder %s24, 1
      %p68 = por %p66, %p67
      %p70 = scmp.ne.s32.totalorder %s55, %s69
      %p71 = scmp.eq.s32.totalorder %s24, 0
      %p72 = por %p70, %p71
      %s74 = sadd.s32 %s73, 1
      %p77 = scmp.eq.s32.totalorder %s18, 1
      %p78 = scmp.ne.s32.totalorder %s73, %s75
      %p79 = scmp.eq.s32.totalorder %s18, 0
      %p80 = por %p78, %p79
      %p81 = scmp.ne.s32.totalorder %s73, %s75
      %p82 = scmp.eq.s32.totalorder %s23, 1
      %p83 = por %p81, %p82
      %p84 = scmp.ne.s32.totalorder %s75, %s76
      %p85 = scmp.eq.s32.totalorder %s23, 0
      %p86 = por %p84, %p85
      %p87 = scmp.ne.s32.totalorder %s75, %s76
      %p88 = scmp.eq.s32.totalorder %s24, 1
      %p89 = por %p87, %p88
      %p91 = scmp.ne.s32.totalorder %s76, %s90
      %p92 = scmp.eq.s32.totalorder %s24, 0
      %p93 = por %p91, %p92
      %s95 = sadd.s32 %s94, 1
      %p98 = scmp.eq.s32.totalorder %s18, 1
      %p99 = scmp.ne.s32.totalorder %s94, %s96
      %p100 = scmp.eq.s32.totalorder %s18, 0
      %p101 = por %p99, %p100
      %p102 = scmp.ne.s32.totalorder %s94, %s96
      %p103 = scmp.eq.s32.totalorder %s23, 1
      %p104 = por %p102, %p103
      %p105 = scmp.ne.s32.totalorder %s96, %s97
      %p106 = scmp.eq.s32.totalorder %s23, 0
      %p107 = por %p105, %p106
      %p108 = scmp.ne.s32.totalorder %s96, %s97
      %p109 = scmp.eq.s32.totalorder %s24, 1
      %p110 = por %p108, %p109
      %p112 = scmp.ne.s32.totalorder %s97, %s111
      %p113 = scmp.eq.s32.totalorder %s24, 0
      %p114 = por %p112, %p113
      %s116 = sadd.s32 %s115, 1
      %p119 = scmp.eq.s32.totalorder %s18, 1
      %p120 = scmp.ne.s32.totalorder %s115, %s117
      %p121 = scmp.eq.s32.totalorder %s18, 0
      %p122 = por %p120, %p121
      %p123 = scmp.ne.s32.totalorder %s115, %s117
      %p124 = scmp.eq.s32.totalorder %s23, 1
      %p125 = por %p123, %p124
      %p126 = scmp.ne.s32.totalorder %s117, %s118
      %p127 = scmp.eq.s32.totalorder %s23, 0
      %p128 = por %p126, %p127
      %p129 = scmp.ne.s32.totalorder %s117, %s118
      %p130 = scmp.eq.s32.totalorder %s24, 1
      %p131 = por %p129, %p130
      %p133 = scmp.ne.s32.totalorder %s118, %s132
      %p134 = scmp.eq.s32.totalorder %s24, 0
      %p135 = por %p133, %p134
      %s136 = ssub.s32 %s18, %s25
      %p137 = scmp.eq.s32.totalorder %s136, 0
      %s139 = sadd.s32 %s138, 1
      %s140 = scalar_select %p137, %s138, %s139
      %p143 = pneg %p137
      %p144 = scmp.eq.s32.totalorder %s18, 1
      %p145 = por %p143, %p144
      %p146 = scmp.ne.s32.totalorder %s138, %s141
      %p147 = scmp.eq.s32.totalorder %s18, 0
      %p148 = por %p146, %p147
      %p149 = scmp.ne.s32.totalorder %s138, %s141
      %p150 = scmp.eq.s32.totalorder %s23, 1
      %p151 = por %p149, %p150
      %p152 = scmp.ne.s32.totalorder %s141, %s142
      %p153 = scmp.eq.s32.totalorder %s23, 0
      %p154 = por %p152, %p153
      %p155 = scmp.ne.s32.totalorder %s141, %s142
      %p156 = scmp.eq.s32.totalorder %s24, 1
      %p157 = por %p155, %p156
      %p159 = scmp.ne.s32.totalorder %s142, %s158
      %p160 = scmp.eq.s32.totalorder %s24, 0
      %p161 = por %p159, %p160
      %p162 = scmp.le.s32.totalorder 1, %s18
      %p163 = scmp.lt.s32.totalorder %s18, 3
      %p164 = pnand %p162, %p163
      %p165 = pneg %p164
      // Predicated region
      $region9: #{tpu_custom_call.1} parent=5 // pred_check
        _
      $region10: #{tpu_custom_call.1} parent=5 // pred_check_branch
        %167 = sbr.rel (%p164) target = $region12
      $region11: #{tpu_custom_call.1} parent=5 // pred_region
        %s168 = ssub.s32 %s18, 1
        // Predicated region
        $region13: #{tpu_custom_call.1} parent=11 // pred_check
          %p169 = pneg %p65
        $region14: #{tpu_custom_call.1} parent=11 // pred_check_branch
          %171 = sbr.rel (%p169) target = $region16
        $region15: #{tpu_custom_call.1} parent=11 // pred_region
          _
        $region16: #{tpu_custom_call.1} parent=11 // pred_fallthru
          _
        // Predicated region
        $region17: #{tpu_custom_call.1} parent=11 // pred_check
          %p172 = pneg %p86
        $region18: #{tpu_custom_call.1} parent=11 // pred_check_branch
          %174 = sbr.rel (%p172) target = $region20
        $region19: #{tpu_custom_call.1} parent=11 // pred_region
          %176 = vsyncadd [#allocation9], 0
          %s177 = sshll.u32 %s2, 4
          %s178 = int_to_ptr.hbm [resolvable:$true] %s177
          %s179 = sshll.u32 [#allocation8], 4
          %s180 = int_to_ptr.vmem [resolvable:$true] %s179
          %185 = dma.hbm_to_vmem [thread:$0]  %s178, 256, %s180, [#allocation9], 128, 128, 8
        $region20: #{tpu_custom_call.1} parent=11 // pred_fallthru
          _
        // Predicated region
        $region21: #{tpu_custom_call.1} parent=11 // pred_check
          %p186 = pneg %p107
        $region22: #{tpu_custom_call.1} parent=11 // pred_check_branch
          %188 = sbr.rel (%p186) target = $region24
        $region23: #{tpu_custom_call.1} parent=11 // pred_region
          _
        $region24: #{tpu_custom_call.1} parent=11 // pred_fallthru
          _
        // Predicated region
        $region25: #{tpu_custom_call.1} parent=11 // pred_check
          %p189 = pneg %p128
        $region26: #{tpu_custom_call.1} parent=11 // pred_check_branch
          %191 = sbr.rel (%p189) target = $region28
        $region27: #{tpu_custom_call.1} parent=11 // pred_region
          _
        $region28: #{tpu_custom_call.1} parent=11 // pred_fallthru
          _
      $region12: #{tpu_custom_call.1} parent=5 // pred_fallthru
        _
      %p192 = scmp.lt.s32.totalorder %s18, 2
      // Predicated region
      $region29: #{tpu_custom_call.1} parent=5 // pred_check
        %p193 = pneg %p192
      $region30: #{tpu_custom_call.1} parent=5 // pred_check_branch
        %195 = sbr.rel (%p193) target = $region32
      $region31: #{tpu_custom_call.1} parent=5 // pred_region
        // Predicated region
        $region33: #{tpu_custom_call.1} parent=31 // pred_check
          %p196 = pneg %p38
        $region34: #{tpu_custom_call.1} parent=31 // pred_check_branch
          %198 = sbr.rel (%p196) target = $region36
        $region35: #{tpu_custom_call.1} parent=31 // pred_region
          %s199 = sand.u32 %s28, 1
          %s200 = scalar_lea.sflag [#allocation6], %s199
          %s201 = sand.u32 %s28, 1
          %s202 = smul.addr %s201, 16
          %s203 = scalar_lea.vmem [#allocation5], %s202
          %205 = vsyncadd %s200, 0
          %s206 = smul.addr %s18, 4
          %s207 = smul.addr %s206, 4
          %s208 = scalar_lea.hbm %s0, %s207
          %s209 = sshll.u32 %s208, 4
          %s210 = int_to_ptr.hbm [resolvable:$true] %s209
          %s211 = sshll.u32 %s203, 4
          %s212 = int_to_ptr.vmem [resolvable:$true] %s211
          %217 = dma.hbm_to_vmem [thread:$0]  %s210, 256, %s212, %s200, 128, 128, 8
        $region36: #{tpu_custom_call.1} parent=31 // pred_fallthru
          _
      $region32: #{tpu_custom_call.1} parent=5 // pred_fallthru
        _
      %p218 = scmp.le.s32.totalorder 1, %s18
      %p219 = scmp.lt.s32.totalorder %s18, 3
      %p220 = pnand %p218, %p219
      %p221 = pneg %p220
      // Predicated region
      $region37: #{tpu_custom_call.1} parent=5 // pred_check
        _
      $region38: #{tpu_custom_call.1} parent=5 // pred_check_branch
        %223 = sbr.rel (%p220) target = $region40
      $region39: #{tpu_custom_call.1} parent=5 // pred_region
        %s224 = ssub.s32 %s18, 1
        %s225 = sand.u32 %s31, 1
        %s226 = scalar_lea.sflag [#allocation6], %s225
        %s227 = sand.u32 %s31, 1
        %s228 = smul.addr %s227, 16
        %s229 = scalar_lea.vmem [#allocation5], %s228
        // Predicated region
        $region41: #{tpu_custom_call.1} parent=39 // pred_check
          %p230 = pneg %p44
        $region42: #{tpu_custom_call.1} parent=39 // pred_check_branch
          %232 = sbr.rel (%p230) target = $region44
        $region43: #{tpu_custom_call.1} parent=39 // pred_region
          %234 = dma.done %s226, 256
        $region44: #{tpu_custom_call.1} parent=39 // pred_fallthru
          _
        // Predicated region
        $region45: #{tpu_custom_call.1} parent=39 // pred_check
          %p235 = pneg %p86
        $region46: #{tpu_custom_call.1} parent=39 // pred_check_branch
          %237 = sbr.rel (%p235) target = $region48
        $region47: #{tpu_custom_call.1} parent=39 // pred_region
          %239 = dma.done [#allocation9], 256
        $region48: #{tpu_custom_call.1} parent=39 // pred_fallthru
          _
        %s240 = sand.u32 %s31, 1
        %s241 = scalar_lea.sflag [#allocation6], %s240
        %s242 = sand.u32 %s31, 1
        %s243 = smul.addr %s242, 16
        %s244 = scalar_lea.vmem [#allocation5], %s243
        %p245 = pneg %p44
        %p246 = pneg %p41
        %p247 = pneg %p65
        %p248 = pneg %p62
        %p249 = pneg %p86
        %p250 = pneg %p83
        %p251 = pneg %p107
        %p252 = pneg %p104
        %p253 = pneg %p128
        %p254 = pneg %p125
        %p255 = pneg %p154
        %p256 = pneg %p151
        %s257 = sand.u32 %s141, 1
        %s258 = scalar_lea.sflag [#allocation7], %s257
        %s259 = sand.u32 %s141, 1
        %s260 = smul.addr %s259, 16
        %s261 = scalar_lea.vmem [#allocation10], %s260
        %263 = vst [vmem:[#allocation2] sm:$0xf] 0
        %264 = vst [vmem:[#allocation2 + $0x10] sm:$0xf] 0
        %265 = vst [vmem:[#allocation2 + $0xc] sm:$0xf] 0
        %266 = vst [vmem:[#allocation2 + $0x1c] sm:$0xf] 0
        %267 = vst [vmem:[#allocation3] sm:$0xf] 0
        %268 = vst [vmem:[#allocation3 + $0x10] sm:$0xf] 0
        %269 = vst [vmem:[#allocation3 + $0xc] sm:$0xf] 0
        %270 = vst [vmem:[#allocation3 + $0x1c] sm:$0xf] 0
        %v271 = vld [vmem:[%s229] sm:$0xff]
        %v272 = vld [vmem:[%s229 + $0x8] sm:$0xff]
        %273 = vst [vmem:[#allocation2 + $0x4] sm:$0xff] %v271
        %274 = vst [vmem:[#allocation2 + $0x14] sm:$0xff] %v272
        %v275 = vld [vmem:[%s4] sm:$0x3]
        %277 = vst [vmem:[#allocation1] ss:$9 sm:$0xff] %v275
        %v278 = vld [vmem:[#allocation1] sm:$0xff]
        %v279 = vld [vmem:[#allocation1 + $0x9] sm:$0xff]
        %v280 = vpack.i.b16 %v278, %v278
        %v282 = vperm.slane %v280, 0
        %v283 = vpack.i.b16 %v279, %v279
        %v285 = vperm.slane %v283, 0
        %v286 = vld [vmem:[%s4] sm:$0x3]
        %288 = vst [vmem:[#allocation1] ss:$9 sm:$0xff] %v286
        %v289 = vld [vmem:[#allocation1] sm:$0xff]
        %v290 = vld [vmem:[#allocation1 + $0x9] sm:$0xff]
        %v291 = vshrl.u32 %v289, 16
        %v292 = vpack.i.b16 %v291, %v291
        %v294 = vperm.slane %v292, 0
        %v295 = vshrl.u32 %v290, 16
        %v296 = vpack.i.b16 %v295, %v295
        %v298 = vperm.slane %v296, 0
        %v299 = vld [vmem:[%s3] sm:$0xff]
        %v300 = vld [vmem:[%s3 + $0x8] sm:$0xff]
        %v301 = vld [vmem:[#allocation2] sm:$0xff]
        %v302 = vld [vmem:[#allocation2 + $0x8] sm:$0xf]
        %v303 = vld [vmem:[#allocation2 + $0x10] sm:$0xff]
        %v304 = vld [vmem:[#allocation2 + $0x18] sm:$0xf]
        %v305 = vunpack.c.l.bf16 %v301
        %v306 = vunpack.c.h.bf16 %v301
        %v307 = vunpack.c.l.bf16 %v302
        %v308 = vunpack.c.l.bf16 %v303
        %v309 = vunpack.c.h.bf16 %v303
        %v310 = vunpack.c.l.bf16 %v304
        %v311 = vunpack.c.l.bf16 %v282
        %v312 = vunpack.c.l.bf16 %v285
        %315 = vrot.lane.b32.xlu0 %v311, 111
        %v316 = vpop.permute.xlu0 %315
        %317 = vrot.lane.b32.xlu0 %v312, 111
        %v318 = vpop.permute.xlu0 %317
        %vm319 = vcmask 908288
        %v320 = vsel %vm319, %v316, %v318
        %v324 = vmul.f32 %v305, %v316
        %v325 = vmul.f32 %v306, %v320
        %v326 = vmul.f32 %v307, %v318
        %v327 = vmul.f32 %v308, %v316
        %v328 = vmul.f32 %v309, %v320
        %v329 = vmul.f32 %v310, %v318
        %v330 = vpack.c.bf16 %v325, %v324
        %v331 = vpack.c.bf16 %v326, %v326
        %v332 = vpack.c.bf16 %v328, %v327
        %v333 = vpack.c.bf16 %v329, %v329
        %338 = vrot.lane.b32.xlu0 %v330, 17
        %v339 = vpop.permute.xlu0 %338
        %340 = vrot.lane.b32.xlu0 %v331, 17
        %v341 = vpop.permute.xlu0 %340
        %342 = vrot.lane.b32.xlu0 %v332, 17
        %v343 = vpop.permute.xlu0 %342
        %344 = vrot.lane.b32.xlu0 %v333, 17
        %v345 = vpop.permute.xlu0 %344
        %v346 = vrot.slane %v339, 4
        %v347 = vrot.slane %v341, 4
        %v348 = vrot.slane %v343, 4
        %v349 = vrot.slane %v345, 4
        %vm350 = vcmask 1043456
        %v351 = vsel %vm350, %v346, %v347
        %vm352 = vcmask 138240
        %v353 = vsel %vm352, %v339, %v351
        %v354 = vsel %vm350, %v348, %v349
        %v355 = vsel %vm352, %v343, %v354
        %358 = vst [vmem:[#allocation4] sm:$0xff] %v353
        %359 = vst [vmem:[#allocation4 + $0x8] sm:$0xff] %v355
        %v360 = vld [vmem:[#allocation2] sm:$0xff]
        %v361 = vld [vmem:[#allocation2 + $0x8] sm:$0xf]
        %v362 = vld [vmem:[#allocation2 + $0x10] sm:$0xff]
        %v363 = vld [vmem:[#allocation2 + $0x18] sm:$0xf]
        %368 = vrot.lane.b32.xlu0 %v360, 16
        %v369 = vpop.permute.xlu0 %368
        %370 = vrot.lane.b32.xlu0 %v361, 16
        %v371 = vpop.permute.xlu0 %370
        %372 = vrot.lane.b32.xlu0 %v362, 16
        %v373 = vpop.permute.xlu0 %372
        %374 = vrot.lane.b32.xlu0 %v363, 16
        %v375 = vpop.permute.xlu0 %374
        %v376 = vrot.slane %v369, 4
        %v377 = vrot.slane %v371, 4
        %v378 = vrot.slane %v373, 4
        %v379 = vrot.slane %v375, 4
        %v380 = vsel %vm350, %v376, %v377
        %vm381 = vcmask 130048
        %v382 = vsel %vm381, %v369, %v380
        %v383 = vsel %vm350, %v378, %v379
        %v384 = vsel %vm381, %v373, %v383
        %387 = vst [vmem:[#allocation4 + $0x10] sm:$0xff] %v382
        %388 = vst [vmem:[#allocation4 + $0x18] sm:$0xff] %v384
        %v389 = vld [vmem:[#allocation2] sm:$0xff]
        %v390 = vld [vmem:[#allocation2 + $0x8] sm:$0xf]
        %v391 = vld [vmem:[#allocation2 + $0x10] sm:$0xff]
        %v392 = vld [vmem:[#allocation2 + $0x18] sm:$0xf]
        %v393 = vunpack.c.l.bf16 %v389
        %v394 = vunpack.c.h.bf16 %v389
        %v395 = vunpack.c.l.bf16 %v390
        %v396 = vunpack.c.l.bf16 %v391
        %v397 = vunpack.c.h.bf16 %v391
        %v398 = vunpack.c.l.bf16 %v392
        %v399 = vunpack.c.l.bf16 %v294
        %v400 = vunpack.c.l.bf16 %v298
        %403 = vrot.lane.b32.xlu0 %v399, 113
        %v404 = vpop.permute.xlu0 %403
        %405 = vrot.lane.b32.xlu0 %v400, 113
        %v406 = vpop.permute.xlu0 %405
        %vm407 = vcmask 924672
        %v408 = vsel %vm407, %v404, %v406
        %v412 = vmul.f32 %v393, %v404
        %v413 = vmul.f32 %v394, %v408
        %v414 = vmul.f32 %v395, %v406
        %v415 = vmul.f32 %v396, %v404
        %v416 = vmul.f32 %v397, %v408
        %v417 = vmul.f32 %v398, %v406
        %v418 = vpack.c.bf16 %v413, %v412
        %v419 = vpack.c.bf16 %v414, %v414
        %v420 = vpack.c.bf16 %v416, %v415
        %v421 = vpack.c.bf16 %v417, %v417
        %426 = vrot.lane.b32.xlu0 %v418, 15
        %v427 = vpop.permute.xlu0 %426
        %428 = vrot.lane.b32.xlu0 %v419, 15
        %v429 = vpop.permute.xlu0 %428
        %430 = vrot.lane.b32.xlu0 %v420, 15
        %v431 = vpop.permute.xlu0 %430
        %432 = vrot.lane.b32.xlu0 %v421, 15
        %v433 = vpop.permute.xlu0 %432
        %v434 = vrot.slane %v427, 4
        %v435 = vrot.slane %v429, 4
        %v436 = vrot.slane %v431, 4
        %v437 = vrot.slane %v433, 4
        %v438 = vsel %vm350, %v434, %v435
        %vm439 = vcmask 121856
        %v440 = vsel %vm439, %v427, %v438
        %v441 = vsel %vm350, %v436, %v437
        %v442 = vsel %vm439, %v431, %v441
        %445 = vst [vmem:[#allocation4 + $0x20] sm:$0xff] %v440
        %446 = vst [vmem:[#allocation4 + $0x28] sm:$0xff] %v442
        %v447 = vld [vmem:[#allocation2] sm:$0xff]
        %v448 = vld [vmem:[#allocation2 + $0x8] sm:$0xf]
        %v449 = vld [vmem:[#allocation2 + $0x10] sm:$0xff]
        %v450 = vld [vmem:[#allocation2 + $0x18] sm:$0xf]
        %v451 = vunpack.c.l.bf16 %v447
        %v452 = vunpack.c.h.bf16 %v447
        %v453 = vunpack.c.l.bf16 %v448
        %v454 = vunpack.c.l.bf16 %v449
        %v455 = vunpack.c.h.bf16 %v449
        %v456 = vunpack.c.l.bf16 %v450
        %457 = vrot.lane.b32.xlu0 %v311, 127
        %v458 = vpop.permute.xlu0 %457
        %459 = vrot.lane.b32.xlu0 %v312, 127
        %v460 = vpop.permute.xlu0 %459
        %vm461 = vcmask 1039360
        %v462 = vsel %vm461, %v458, %v460
        %v466 = vmul.f32 %v451, %v458
        %v467 = vmul.f32 %v452, %v462
        %v468 = vmul.f32 %v453, %v460
        %v469 = vmul.f32 %v454, %v458
        %v470 = vmul.f32 %v455, %v462
        %v471 = vmul.f32 %v456, %v460
        %v472 = vpack.c.bf16 %v467, %v466
        %v473 = vpack.c.bf16 %v468, %v468
        %v474 = vpack.c.bf16 %v470, %v469
        %v475 = vpack.c.bf16 %v471, %v471
        %480 = vrot.lane.b32.xlu0 %v472, 1
        %v481 = vpop.permute.xlu0 %480
        %482 = vrot.lane.b32.xlu0 %v473, 1
        %v483 = vpop.permute.xlu0 %482
        %484 = vrot.lane.b32.xlu0 %v474, 1
        %v485 = vpop.permute.xlu0 %484
        %486 = vrot.lane.b32.xlu0 %v475, 1
        %v487 = vpop.permute.xlu0 %486
        %v488 = vrot.slane %v481, 4
        %v489 = vrot.slane %v483, 4
        %v490 = vrot.slane %v485, 4
        %v491 = vrot.slane %v487, 4
        %v492 = vsel %vm350, %v488, %v489
        %vm493 = vcmask 7168
        %v494 = vsel %vm493, %v481, %v492
        %v495 = vsel %vm350, %v490, %v491
        %v496 = vsel %vm493, %v485, %v495
        %499 = vst [vmem:[#allocation4 + $0x30] sm:$0xff] %v494
        %500 = vst [vmem:[#allocation4 + $0x38] sm:$0xff] %v496
        %v501 = vld [vmem:[#allocation2 + $0x4] sm:$0xff]
        %v502 = vld [vmem:[#allocation2 + $0x14] sm:$0xff]
        %503 = vst [vmem:[#allocation4 + $0x40] sm:$0xff] %v501
        %504 = vst [vmem:[#allocation4 + $0x48] sm:$0xff] %v502
        %v505 = vld [vmem:[#allocation2 + $0x4] sm:$0xff]
        %v506 = vld [vmem:[#allocation2 + $0xc] sm:$0xf]
        %v507 = vld [vmem:[#allocation2 + $0x14] sm:$0xff]
        %v508 = vld [vmem:[#allocation2 + $0x1c] sm:$0xf]
        %v509 = vunpack.c.l.bf16 %v505
        %v510 = vunpack.c.h.bf16 %v505
        %v511 = vunpack.c.l.bf16 %v506
        %v512 = vunpack.c.l.bf16 %v507
        %v513 = vunpack.c.h.bf16 %v507
        %v514 = vunpack.c.l.bf16 %v508
        %515 = vrot.lane.b32.xlu0 %v399, 1
        %v516 = vpop.permute.xlu0 %515
        %517 = vrot.lane.b32.xlu0 %v400, 1
        %v518 = vpop.permute.xlu0 %517
        %vm519 = vcmask 7168
        %v520 = vsel %vm519, %v516, %v518
        %v524 = vmul.f32 %v509, %v516
        %v525 = vmul.f32 %v510, %v520
        %v526 = vmul.f32 %v511, %v518
        %v527 = vmul.f32 %v512, %v516
        %v528 = vmul.f32 %v513, %v520
        %v529 = vmul.f32 %v514, %v518
        %v530 = vpack.c.bf16 %v525, %v524
        %v531 = vpack.c.bf16 %v526, %v526
        %v532 = vpack.c.bf16 %v528, %v527
        %v533 = vpack.c.bf16 %v529, %v529
        %538 = vrot.lane.b32.xlu0 %v530, 127
        %v539 = vpop.permute.xlu0 %538
        %540 = vrot.lane.b32.xlu0 %v531, 127
        %v541 = vpop.permute.xlu0 %540
        %542 = vrot.lane.b32.xlu0 %v532, 127
        %v543 = vpop.permute.xlu0 %542
        %544 = vrot.lane.b32.xlu0 %v533, 127
        %v545 = vpop.permute.xlu0 %544
        %v546 = vrot.slane %v539, 4
        %v547 = vrot.slane %v541, 4
        %v548 = vrot.slane %v543, 4
        %v549 = vrot.slane %v545, 4
        %v550 = vsel %vm350, %v546, %v547
        %vm551 = vcmask 1039360
        %v552 = vsel %vm551, %v539, %v550
        %v553 = vsel %vm350, %v548, %v549
        %v554 = vsel %vm551, %v543, %v553
        %557 = vst [vmem:[#allocation4 + $0x50] sm:$0xff] %v552
        %558 = vst [vmem:[#allocation4 + $0x58] sm:$0xff] %v554
        %v559 = vld [vmem:[#allocation2 + $0x4] sm:$0xff]
        %v560 = vld [vmem:[#allocation2 + $0xc] sm:$0xf]
        %v561 = vld [vmem:[#allocation2 + $0x14] sm:$0xff]
        %v562 = vld [vmem:[#allocation2 + $0x1c] sm:$0xf]
        %v563 = vunpack.c.l.bf16 %v559
        %v564 = vunpack.c.h.bf16 %v559
        %v565 = vunpack.c.l.bf16 %v560
        %v566 = vunpack.c.l.bf16 %v561
        %v567 = vunpack.c.h.bf16 %v561
        %v568 = vunpack.c.l.bf16 %v562
        %569 = vrot.lane.b32.xlu0 %v311, 15
        %v570 = vpop.permute.xlu0 %569
        %571 = vrot.lane.b32.xlu0 %v312, 15
        %v572 = vpop.permute.xlu0 %571
        %vm573 = vcmask 121856
        %v574 = vsel %vm573, %v570, %v572
        %v578 = vmul.f32 %v563, %v570
        %v579 = vmul.f32 %v564, %v574
        %v580 = vmul.f32 %v565, %v572
        %v581 = vmul.f32 %v566, %v570
        %v582 = vmul.f32 %v567, %v574
        %v583 = vmul.f32 %v568, %v572
        %v584 = vpack.c.bf16 %v579, %v578
        %v585 = vpack.c.bf16 %v580, %v580
        %v586 = vpack.c.bf16 %v582, %v581
        %v587 = vpack.c.bf16 %v583, %v583
        %592 = vrot.lane.b32.xlu0 %v584, 113
        %v593 = vpop.permute.xlu0 %592
        %594 = vrot.lane.b32.xlu0 %v585, 113
        %v595 = vpop.permute.xlu0 %594
        %596 = vrot.lane.b32.xlu0 %v586, 113
        %v597 = vpop.permute.xlu0 %596
        %598 = vrot.lane.b32.xlu0 %v587, 113
        %v599 = vpop.permute.xlu0 %598
        %v600 = vrot.slane %v593, 4
        %v601 = vrot.slane %v595, 4
        %v602 = vrot.slane %v597, 4
        %v603 = vrot.slane %v599, 4
        %v604 = vsel %vm350, %v600, %v601
        %vm605 = vcmask 924672
        %v606 = vsel %vm605, %v593, %v604
        %v607 = vsel %vm350, %v602, %v603
        %v608 = vsel %vm605, %v597, %v607
        %611 = vst [vmem:[#allocation4 + $0x60] sm:$0xff] %v606
        %612 = vst [vmem:[#allocation4 + $0x68] sm:$0xff] %v608
        %v613 = vld [vmem:[#allocation2 + $0x4] sm:$0xff]
        %v614 = vld [vmem:[#allocation2 + $0xc] sm:$0xf]
        %v615 = vld [vmem:[#allocation2 + $0x14] sm:$0xff]
        %v616 = vld [vmem:[#allocation2 + $0x1c] sm:$0xf]
        %621 = vrot.lane.b32.xlu0 %v613, 112
        %v622 = vpop.permute.xlu0 %621
        %623 = vrot.lane.b32.xlu0 %v614, 112
        %v624 = vpop.permute.xlu0 %623
        %625 = vrot.lane.b32.xlu0 %v615, 112
        %v626 = vpop.permute.xlu0 %625
        %627 = vrot.lane.b32.xlu0 %v616, 112
        %v628 = vpop.permute.xlu0 %627
        %v629 = vrot.slane %v622, 4
        %v630 = vrot.slane %v624, 4
        %v631 = vrot.slane %v626, 4
        %v632 = vrot.slane %v628, 4
        %v633 = vsel %vm350, %v629, %v630
        %vm634 = vcmask 916480
        %v635 = vsel %vm634, %v622, %v633
        %v636 = vsel %vm350, %v631, %v632
        %v637 = vsel %vm634, %v626, %v636
        %640 = vst [vmem:[#allocation4 + $0x70] sm:$0xff] %v635
        %641 = vst [vmem:[#allocation4 + $0x78] sm:$0xff] %v637
        %v642 = vld [vmem:[#allocation2 + $0x4] sm:$0xff]
        %v643 = vld [vmem:[#allocation2 + $0xc] sm:$0xf]
        %v644 = vld [vmem:[#allocation2 + $0x14] sm:$0xff]
        %v645 = vld [vmem:[#allocation2 + $0x1c] sm:$0xf]
        %v646 = vunpack.c.l.bf16 %v642
        %v647 = vunpack.c.h.bf16 %v642
        %v648 = vunpack.c.l.bf16 %v643
        %v649 = vunpack.c.l.bf16 %v644
        %v650 = vunpack.c.h.bf16 %v644
        %v651 = vunpack.c.l.bf16 %v645
        %652 = vrot.lane.b32.xlu0 %v399, 17
        %v653 = vpop.permute.xlu0 %652
        %654 = vrot.lane.b32.xlu0 %v400, 17
        %v655 = vpop.permute.xlu0 %654
        %vm656 = vcmask 138240
        %v657 = vsel %vm656, %v653, %v655
        %v661 = vmul.f32 %v646, %v653
        %v662 = vmul.f32 %v647, %v657
        %v663 = vmul.f32 %v648, %v655
        %v664 = vmul.f32 %v649, %v653
        %v665 = vmul.f32 %v650, %v657
        %v666 = vmul.f32 %v651, %v655
        %v667 = vpack.c.bf16 %v662, %v661
        %v668 = vpack.c.bf16 %v663, %v663
        %v669 = vpack.c.bf16 %v665, %v664
        %v670 = vpack.c.bf16 %v666, %v666
        %675 = vrot.lane.b32.xlu0 %v667, 111
        %v676 = vpop.permute.xlu0 %675
        %677 = vrot.lane.b32.xlu0 %v668, 111
        %v678 = vpop.permute.xlu0 %677
        %679 = vrot.lane.b32.xlu0 %v669, 111
        %v680 = vpop.permute.xlu0 %679
        %681 = vrot.lane.b32.xlu0 %v670, 111
        %v682 = vpop.permute.xlu0 %681
        %v683 = vrot.slane %v676, 4
        %v684 = vrot.slane %v678, 4
        %v685 = vrot.slane %v680, 4
        %v686 = vrot.slane %v682, 4
        %v687 = vsel %vm350, %v683, %v684
        %vm688 = vcmask 908288
        %v689 = vsel %vm688, %v676, %v687
        %v690 = vsel %vm350, %v685, %v686
        %v691 = vsel %vm688, %v680, %v690
        %694 = vst [vmem:[#allocation4 + $0x80] sm:$0xff] %v689
        %695 = vst [vmem:[#allocation4 + $0x88] sm:$0xff] %v691
        %v696 = vld [vmem:[%s1] sm:$0xff]
        %v697 = vld [vmem:[%s1 + $0x8] sm:$0xff]
        %v698 = vld [vmem:[#allocation4] sm:$0xff]
        %v699 = vld [vmem:[#allocation4 + $0x8] sm:$0xff]
        %v700 = vld [vmem:[#allocation4 + $0x10] sm:$0xff]
        %v701 = vld [vmem:[#allocation4 + $0x18] sm:$0xff]
        %v702 = vld [vmem:[#allocation4 + $0x20] sm:$0xff]
        %v703 = vld [vmem:[#allocation4 + $0x28] sm:$0xff]
        %v704 = vld [vmem:[#allocation4 + $0x30] sm:$0xff]
        %v705 = vld [vmem:[#allocation4 + $0x38] sm:$0xff]
        %v706 = vld [vmem:[#allocation4 + $0x40] sm:$0xff]
        %v707 = vld [vmem:[#allocation4 + $0x48] sm:$0xff]
        %v708 = vld [vmem:[#allocation4 + $0x50] sm:$0xff]
        %v709 = vld [vmem:[#allocation4 + $0x58] sm:$0xff]
        %v710 = vld [vmem:[#allocation4 + $0x60] sm:$0xff]
        %v711 = vld [vmem:[#allocation4 + $0x68] sm:$0xff]
        %v712 = vld [vmem:[#allocation4 + $0x70] sm:$0xff]
        %v713 = vld [vmem:[#allocation4 + $0x78] sm:$0xff]
        %v714 = vld [vmem:[#allocation4 + $0x80] sm:$0xff]
        %v715 = vld [vmem:[#allocation4 + $0x88] sm:$0xff]
        %v718 = vunpack.c.l.b16 %v696
        %v719 = vunpack.c.h.b16 %v696
        %v720 = vunpack.c.l.b16 %v697
        %v721 = vunpack.c.h.b16 %v697
        %v722 = vpack.c.b16 %v720, %v718
        %v723 = vpack.c.b16 %v721, %v719
        %v743 = vunpack.c.l.b16 %v698
        %v744 = vunpack.c.h.b16 %v698
        %v745 = vunpack.c.l.b16 %v699
        %v746 = vunpack.c.h.b16 %v699
        %v747 = vunpack.c.l.b16 %v700
        %v748 = vunpack.c.h.b16 %v700
        %v749 = vunpack.c.l.b16 %v701
        %v750 = vunpack.c.h.b16 %v701
        %v751 = vunpack.c.l.b16 %v702
        %v752 = vunpack.c.h.b16 %v702
        %v753 = vunpack.c.l.b16 %v703
        %v754 = vunpack.c.h.b16 %v703
        %v755 = vunpack.c.l.b16 %v704
        %v756 = vunpack.c.h.b16 %v704
        %v757 = vunpack.c.l.b16 %v705
        %v758 = vunpack.c.h.b16 %v705
        %v759 = vunpack.c.l.b16 %v706
        %v760 = vunpack.c.h.b16 %v706
        %v761 = vunpack.c.l.b16 %v707
        %v762 = vunpack.c.h.b16 %v707
        %v763 = vunpack.c.l.b16 %v708
        %v764 = vunpack.c.h.b16 %v708
        %v765 = vunpack.c.l.b16 %v709
        %v766 = vunpack.c.h.b16 %v709
        %v767 = vunpack.c.l.b16 %v710
        %v768 = vunpack.c.h.b16 %v710
        %v769 = vunpack.c.l.b16 %v711
        %v770 = vunpack.c.h.b16 %v711
        %v771 = vunpack.c.l.b16 %v712
        %v772 = vunpack.c.h.b16 %v712
        %v773 = vunpack.c.l.b16 %v713
        %v774 = vunpack.c.h.b16 %v713
        %v775 = vunpack.c.l.b16 %v714
        %v776 = vunpack.c.h.b16 %v714
        %v777 = vunpack.c.l.b16 %v715
        %v778 = vunpack.c.h.b16 %v715
        %v779 = vpack.c.b16 %v745, %v743
        %v780 = vpack.c.b16 %v746, %v744
        %v781 = vpack.c.b16 %v749, %v747
        %v782 = vpack.c.b16 %v750, %v748
        %v783 = vpack.c.b16 %v753, %v751
        %v784 = vpack.c.b16 %v754, %v752
        %v785 = vpack.c.b16 %v757, %v755
        %v786 = vpack.c.b16 %v758, %v756
        %v787 = vpack.c.b16 %v761, %v759
        %v788 = vpack.c.b16 %v762, %v760
        %v789 = vpack.c.b16 %v765, %v763
        %v790 = vpack.c.b16 %v766, %v764
        %v791 = vpack.c.b16 %v769, %v767
        %v792 = vpack.c.b16 %v770, %v768
        %v793 = vpack.c.b16 %v773, %v771
        %v794 = vpack.c.b16 %v774, %v772
        %v795 = vpack.c.b16 %v777, %v775
        %v796 = vpack.c.b16 %v778, %v776
        %vm815 = vcmask 130048
        %v817 = vsel %vm815, %v723, 0
        %819 = vmatpush.bf16.msra.mxu0 %v793
        %820 = vmatpush.bf16.msra.mxu0 %v791
        %821 = vmatpush.bf16.msra.mxu0 %v789
        %822 = vmatpush.bf16.msra.mxu0 %v787
        %823 = vmatpush.bf16.msra.mxu0 %v785
        %824 = vmatpush.bf16.msra.mxu0 %v783
        %825 = vmatpush.bf16.msra.mxu0 %v781
        %826 = vmatpush.bf16.msra.mxu0 %v779
        %827 = vmatmul.bf16.gmra.mxu0 %v722
        %v828 = vpop.f32.mrf.mxu0
        %v829 = vadd.f32 0.0, %v828
        %v830 = vpop.f32.mrf.mxu0
        %v831 = vadd.f32 0.0, %v830
        %832 = vdwg.mxu0
        %833 = vmatpush.bf16.msra.mxu0 0
        %834 = vmatpush.bf16.msra.mxu0 0
        %835 = vmatpush.bf16.msra.mxu0 0
        %836 = vmatpush.bf16.msra.mxu0 0
        %837 = vmatpush.bf16.msra.mxu0 0
        %838 = vmatpush.bf16.msra.mxu0 0
        %839 = vmatpush.bf16.msra.mxu0 0
        %840 = vmatpush.bf16.msra.mxu0 %v795
        %841 = vmatmul.bf16.gmra.mxu0 %v817
        %v842 = vpop.f32.mrf.mxu0
        %v843 = vadd.f32 %v829, %v842
        %v844 = vpop.f32.mrf.mxu0
        %v845 = vadd.f32 %v831, %v844
        %846 = vdwg.mxu0
        %847 = vmatpush.bf16.msra.mxu0 %v794
        %848 = vmatpush.bf16.msra.mxu0 %v792
        %849 = vmatpush.bf16.msra.mxu0 %v790
        %850 = vmatpush.bf16.msra.mxu0 %v788
        %851 = vmatpush.bf16.msra.mxu0 %v786
        %852 = vmatpush.bf16.msra.mxu0 %v784
        %853 = vmatpush.bf16.msra.mxu0 %v782
        %854 = vmatpush.bf16.msra.mxu0 %v780
        %855 = vmatmul.bf16.gmra.mxu0 %v722
        %v856 = vpop.f32.mrf.mxu0
        %v857 = vadd.f32 0.0, %v856
        %v858 = vpop.f32.mrf.mxu0
        %v859 = vadd.f32 0.0, %v858
        %860 = vdwg.mxu0
        %861 = vmatpush.bf16.msra.mxu0 0
        %862 = vmatpush.bf16.msra.mxu0 0
        %863 = vmatpush.bf16.msra.mxu0 0
        %864 = vmatpush.bf16.msra.mxu0 0
        %865 = vmatpush.bf16.msra.mxu0 0
        %866 = vmatpush.bf16.msra.mxu0 0
        %867 = vmatpush.bf16.msra.mxu0 0
        %868 = vmatpush.bf16.msra.mxu0 %v796
        %869 = vmatmul.bf16.gmra.mxu0 %v817
        %v870 = vpop.f32.mrf.mxu0
        %v871 = vadd.f32 %v857, %v870
        %v872 = vpop.f32.mrf.mxu0
        %v873 = vadd.f32 %v859, %v872
        %874 = vdwg.mxu0
        %876 = vset.pattern.permute.xlu0 0
        %877 = vperm.xlu0 %876, %v299
        %v878 = vpop.permute.xlu0 %877
        %881 = vset.pattern.permute.xlu0 0
        %882 = vperm.xlu0 %881, %v300
        %v883 = vpop.permute.xlu0 %882
        %v885 = vmul.f32 %v843, %v878
        %v886 = vmul.f32 %v871, %v878
        %v887 = vmul.f32 %v845, %v883
        %v888 = vmul.f32 %v873, %v883
        %889 = vset.pattern.permute.xlu0 1
        %890 = vperm.xlu0 %889, %v299
        %v891 = vpop.permute.xlu0 %890
        %893 = vset.pattern.permute.xlu0 1
        %894 = vperm.xlu0 %893, %v300
        %v895 = vpop.permute.xlu0 %894
        %v897 = vadd.f32 %v885, %v891
        %v898 = vadd.f32 %v886, %v891
        %v899 = vadd.f32 %v887, %v895
        %v900 = vadd.f32 %v888, %v895
        %v901 = vmax.f32 %v897, 0.0
        %v902 = vmax.f32 %v898, 0.0
        %v903 = vmax.f32 %v899, 0.0
        %v904 = vmax.f32 %v900, 0.0
        %v905 = vpack.c.bf16 %v902, %v901
        %v906 = vpack.c.bf16 %v904, %v903
        %907 = vst [vmem:[#allocation3 + $0x4] sm:$0xff] %v905
        %908 = vst [vmem:[#allocation3 + $0x14] sm:$0xff] %v906
        %v909 = vld [vmem:[#allocation3] sm:$0xff]
        %v910 = vld [vmem:[#allocation3 + $0x8] sm:$0xf]
        %v911 = vld [vmem:[#allocation3 + $0x10] sm:$0xff]
        %v912 = vld [vmem:[#allocation3 + $0x18] sm:$0xf]
        %v913 = vunpack.c.l.bf16 %v909
        %v914 = vunpack.c.h.bf16 %v909
        %v915 = vunpack.c.l.bf16 %v910
        %v916 = vunpack.c.l.bf16 %v911
        %v917 = vunpack.c.h.bf16 %v911
        %v918 = vunpack.c.l.bf16 %v912
        %v919 = vmul.f32 %v913, %v316
        %v920 = vmul.f32 %v914, %v320
        %v921 = vmul.f32 %v915, %v318
        %v922 = vmul.f32 %v916, %v316
        %v923 = vmul.f32 %v917, %v320
        %v924 = vmul.f32 %v918, %v318
        %v925 = vpack.c.bf16 %v920, %v919
        %v926 = vpack.c.bf16 %v921, %v921
        %v927 = vpack.c.bf16 %v923, %v922
        %v928 = vpack.c.bf16 %v924, %v924
        %933 = vrot.lane.b32.xlu0 %v925, 17
        %v934 = vpop.permute.xlu0 %933
        %935 = vrot.lane.b32.xlu0 %v926, 17
        %v936 = vpop.permute.xlu0 %935
        %937 = vrot.lane.b32.xlu0 %v927, 17
        %v938 = vpop.permute.xlu0 %937
        %939 = vrot.lane.b32.xlu0 %v928, 17
        %v940 = vpop.permute.xlu0 %939
        %v941 = vrot.slane %v934, 4
        %v942 = vrot.slane %v936, 4
        %v943 = vrot.slane %v938, 4
        %v944 = vrot.slane %v940, 4
        %v945 = vsel %vm350, %v941, %v942
        %v946 = vsel %vm352, %v934, %v945
        %v947 = vsel %vm350, %v943, %v944
        %v948 = vsel %vm352, %v938, %v947
        %951 = vst [vmem:[#allocation4] sm:$0xff] %v946
        %952 = vst [vmem:[#allocation4 + $0x8] sm:$0xff] %v948
        %v953 = vld [vmem:[#allocation3] sm:$0xff]
        %v954 = vld [vmem:[#allocation3 + $0x8] sm:$0xf]
        %v955 = vld [vmem:[#allocation3 + $0x10] sm:$0xff]
        %v956 = vld [vmem:[#allocation3 + $0x18] sm:$0xf]
        %961 = vrot.lane.b32.xlu0 %v953, 16
        %v962 = vpop.permute.xlu0 %961
        %963 = vrot.lane.b32.xlu0 %v954, 16
        %v964 = vpop.permute.xlu0 %963
        %965 = vrot.lane.b32.xlu0 %v955, 16
        %v966 = vpop.permute.xlu0 %965
        %967 = vrot.lane.b32.xlu0 %v956, 16
        %v968 = vpop.permute.xlu0 %967
        %v969 = vrot.slane %v962, 4
        %v970 = vrot.slane %v964, 4
        %v971 = vrot.slane %v966, 4
        %v972 = vrot.slane %v968, 4
        %v973 = vsel %vm350, %v969, %v970
        %v974 = vsel %vm381, %v962, %v973
        %v975 = vsel %vm350, %v971, %v972
        %v976 = vsel %vm381, %v966, %v975
        %979 = vst [vmem:[#allocation4 + $0x10] sm:$0xff] %v974
        %980 = vst [vmem:[#allocation4 + $0x18] sm:$0xff] %v976
        %v981 = vld [vmem:[#allocation3] sm:$0xff]
        %v982 = vld [vmem:[#allocation3 + $0x8] sm:$0xf]
        %v983 = vld [vmem:[#allocation3 + $0x10] sm:$0xff]
        %v984 = vld [vmem:[#allocation3 + $0x18] sm:$0xf]
        %v985 = vunpack.c.l.bf16 %v981
        %v986 = vunpack.c.h.bf16 %v981
        %v987 = vunpack.c.l.bf16 %v982
        %v988 = vunpack.c.l.bf16 %v983
        %v989 = vunpack.c.h.bf16 %v983
        %v990 = vunpack.c.l.bf16 %v984
        %v991 = vmul.f32 %v985, %v404
        %v992 = vmul.f32 %v986, %v408
        %v993 = vmul.f32 %v987, %v406
        %v994 = vmul.f32 %v988, %v404
        %v995 = vmul.f32 %v989, %v408
        %v996 = vmul.f32 %v990, %v406
        %v997 = vpack.c.bf16 %v992, %v991
        %v998 = vpack.c.bf16 %v993, %v993
        %v999 = vpack.c.bf16 %v995, %v994
        %v1000 = vpack.c.bf16 %v996, %v996
        %1005 = vrot.lane.b32.xlu0 %v997, 15
        %v1006 = vpop.permute.xlu0 %1005
        %1007 = vrot.lane.b32.xlu0 %v998, 15
        %v1008 = vpop.permute.xlu0 %1007
        %1009 = vrot.lane.b32.xlu0 %v999, 15
        %v1010 = vpop.permute.xlu0 %1009
        %1011 = vrot.lane.b32.xlu0 %v1000, 15
        %v1012 = vpop.permute.xlu0 %1011
        %v1013 = vrot.slane %v1006, 4
        %v1014 = vrot.slane %v1008, 4
        %v1015 = vrot.slane %v1010, 4
        %v1016 = vrot.slane %v1012, 4
        %v1017 = vsel %vm350, %v1013, %v1014
        %v1018 = vsel %vm439, %v1006, %v1017
        %v1019 = vsel %vm350, %v1015, %v1016
        %v1020 = vsel %vm439, %v1010, %v1019
        %1023 = vst [vmem:[#allocation4 + $0x20] sm:$0xff] %v1018
        %1024 = vst [vmem:[#allocation4 + $0x28] sm:$0xff] %v1020
        %v1025 = vld [vmem:[#allocation3] sm:$0xff]
        %v1026 = vld [vmem:[#allocation3 + $0x8] sm:$0xf]
        %v1027 = vld [vmem:[#allocation3 + $0x10] sm:$0xff]
        %v1028 = vld [vmem:[#allocation3 + $0x18] sm:$0xf]
        %v1029 = vunpack.c.l.bf16 %v1025
        %v1030 = vunpack.c.h.bf16 %v1025
        %v1031 = vunpack.c.l.bf16 %v1026
        %v1032 = vunpack.c.l.bf16 %v1027
        %v1033 = vunpack.c.h.bf16 %v1027
        %v1034 = vunpack.c.l.bf16 %v1028
        %v1035 = vmul.f32 %v1029, %v458
        %v1036 = vmul.f32 %v1030, %v462
        %v1037 = vmul.f32 %v1031, %v460
        %v1038 = vmul.f32 %v1032, %v458
        %v1039 = vmul.f32 %v1033, %v462
        %v1040 = vmul.f32 %v1034, %v460
        %v1041 = vpack.c.bf16 %v1036, %v1035
        %v1042 = vpack.c.bf16 %v1037, %v1037
        %v1043 = vpack.c.bf16 %v1039, %v1038
        %v1044 = vpack.c.bf16 %v1040, %v1040
        %1049 = vrot.lane.b32.xlu0 %v1041, 1
        %v1050 = vpop.permute.xlu0 %1049
        %1051 = vrot.lane.b32.xlu0 %v1042, 1
        %v1052 = vpop.permute.xlu0 %1051
        %1053 = vrot.lane.b32.xlu0 %v1043, 1
        %v1054 = vpop.permute.xlu0 %1053
        %1055 = vrot.lane.b32.xlu0 %v1044, 1
        %v1056 = vpop.permute.xlu0 %1055
        %v1057 = vrot.slane %v1050, 4
        %v1058 = vrot.slane %v1052, 4
        %v1059 = vrot.slane %v1054, 4
        %v1060 = vrot.slane %v1056, 4
        %v1061 = vsel %vm350, %v1057, %v1058
        %v1062 = vsel %vm493, %v1050, %v1061
        %v1063 = vsel %vm350, %v1059, %v1060
        %v1064 = vsel %vm493, %v1054, %v1063
        %1067 = vst [vmem:[#allocation4 + $0x30] sm:$0xff] %v1062
        %1068 = vst [vmem:[#allocation4 + $0x38] sm:$0xff] %v1064
        %v1069 = vld [vmem:[#allocation3 + $0x4] sm:$0xff]
        %v1070 = vld [vmem:[#allocation3 + $0x14] sm:$0xff]
        %1071 = vst [vmem:[#allocation4 + $0x40] sm:$0xff] %v1069
        %1072 = vst [vmem:[#allocation4 + $0x48] sm:$0xff] %v1070
        %v1073 = vld [vmem:[#allocation3 + $0x4] sm:$0xff]
        %v1074 = vld [vmem:[#allocation3 + $0xc] sm:$0xf]
        %v1075 = vld [vmem:[#allocation3 + $0x14] sm:$0xff]
        %v1076 = vld [vmem:[#allocation3 + $0x1c] sm:$0xf]
        %v1077 = vunpack.c.l.bf16 %v1073
        %v1078 = vunpack.c.h.bf16 %v1073
        %v1079 = vunpack.c.l.bf16 %v1074
        %v1080 = vunpack.c.l.bf16 %v1075
        %v1081 = vunpack.c.h.bf16 %v1075
        %v1082 = vunpack.c.l.bf16 %v1076
        %v1083 = vmul.f32 %v1077, %v516
        %v1084 = vmul.f32 %v1078, %v520
        %v1085 = vmul.f32 %v1079, %v518
        %v1086 = vmul.f32 %v1080, %v516
        %v1087 = vmul.f32 %v1081, %v520
        %v1088 = vmul.f32 %v1082, %v518
        %v1089 = vpack.c.bf16 %v1084, %v1083
        %v1090 = vpack.c.bf16 %v1085, %v1085
        %v1091 = vpack.c.bf16 %v1087, %v1086
        %v1092 = vpack.c.bf16 %v1088, %v1088
        %1097 = vrot.lane.b32.xlu0 %v1089, 127
        %v1098 = vpop.permute.xlu0 %1097
        %1099 = vrot.lane.b32.xlu0 %v1090, 127
        %v1100 = vpop.permute.xlu0 %1099
        %1101 = vrot.lane.b32.xlu0 %v1091, 127
        %v1102 = vpop.permute.xlu0 %1101
        %1103 = vrot.lane.b32.xlu0 %v1092, 127
        %v1104 = vpop.permute.xlu0 %1103
        %v1105 = vrot.slane %v1098, 4
        %v1106 = vrot.slane %v1100, 4
        %v1107 = vrot.slane %v1102, 4
        %v1108 = vrot.slane %v1104, 4
        %v1109 = vsel %vm350, %v1105, %v1106
        %v1110 = vsel %vm551, %v1098, %v1109
        %v1111 = vsel %vm350, %v1107, %v1108
        %v1112 = vsel %vm551, %v1102, %v1111
        %1115 = vst [vmem:[#allocation4 + $0x50] sm:$0xff] %v1110
        %1116 = vst [vmem:[#allocation4 + $0x58] sm:$0xff] %v1112
        %v1117 = vld [vmem:[#allocation3 + $0x4] sm:$0xff]
        %v1118 = vld [vmem:[#allocation3 + $0xc] sm:$0xf]
        %v1119 = vld [vmem:[#allocation3 + $0x14] sm:$0xff]
        %v1120 = vld [vmem:[#allocation3 + $0x1c] sm:$0xf]
        %v1121 = vunpack.c.l.bf16 %v1117
        %v1122 = vunpack.c.h.bf16 %v1117
        %v1123 = vunpack.c.l.bf16 %v1118
        %v1124 = vunpack.c.l.bf16 %v1119
        %v1125 = vunpack.c.h.bf16 %v1119
        %v1126 = vunpack.c.l.bf16 %v1120
        %v1127 = vmul.f32 %v1121, %v570
        %v1128 = vmul.f32 %v1122, %v574
        %v1129 = vmul.f32 %v1123, %v572
        %v1130 = vmul.f32 %v1124, %v570
        %v1131 = vmul.f32 %v1125, %v574
        %v1132 = vmul.f32 %v1126, %v572
        %v1133 = vpack.c.bf16 %v1128, %v1127
        %v1134 = vpack.c.bf16 %v1129, %v1129
        %v1135 = vpack.c.bf16 %v1131, %v1130
        %v1136 = vpack.c.bf16 %v1132, %v1132
        %1141 = vrot.lane.b32.xlu0 %v1133, 113
        %v1142 = vpop.permute.xlu0 %1141
        %1143 = vrot.lane.b32.xlu0 %v1134, 113
        %v1144 = vpop.permute.xlu0 %1143
        %1145 = vrot.lane.b32.xlu0 %v1135, 113
        %v1146 = vpop.permute.xlu0 %1145
        %1147 = vrot.lane.b32.xlu0 %v1136, 113
        %v1148 = vpop.permute.xlu0 %1147
        %v1149 = vrot.slane %v1142, 4
        %v1150 = vrot.slane %v1144, 4
        %v1151 = vrot.slane %v1146, 4
        %v1152 = vrot.slane %v1148, 4
        %v1153 = vsel %vm350, %v1149, %v1150
        %v1154 = vsel %vm605, %v1142, %v1153
        %v1155 = vsel %vm350, %v1151, %v1152
        %v1156 = vsel %vm605, %v1146, %v1155
        %1159 = vst [vmem:[#allocation4 + $0x60] sm:$0xff] %v1154
        %1160 = vst [vmem:[#allocation4 + $0x68] sm:$0xff] %v1156
        %v1161 = vld [vmem:[#allocation3 + $0x4] sm:$0xff]
        %v1162 = vld [vmem:[#allocation3 + $0xc] sm:$0xf]
        %v1163 = vld [vmem:[#allocation3 + $0x14] sm:$0xff]
        %v1164 = vld [vmem:[#allocation3 + $0x1c] sm:$0xf]
        %1169 = vrot.lane.b32.xlu0 %v1161, 112
        %v1170 = vpop.permute.xlu0 %1169
        %1171 = vrot.lane.b32.xlu0 %v1162, 112
        %v1172 = vpop.permute.xlu0 %1171
        %1173 = vrot.lane.b32.xlu0 %v1163, 112
        %v1174 = vpop.permute.xlu0 %1173
        %1175 = vrot.lane.b32.xlu0 %v1164, 112
        %v1176 = vpop.permute.xlu0 %1175
        %v1177 = vrot.slane %v1170, 4
        %v1178 = vrot.slane %v1172, 4
        %v1179 = vrot.slane %v1174, 4
        %v1180 = vrot.slane %v1176, 4
        %v1181 = vsel %vm350, %v1177, %v1178
        %v1182 = vsel %vm634, %v1170, %v1181
        %v1183 = vsel %vm350, %v1179, %v1180
        %v1184 = vsel %vm634, %v1174, %v1183
        %1187 = vst [vmem:[#allocation4 + $0x70] sm:$0xff] %v1182
        %1188 = vst [vmem:[#allocation4 + $0x78] sm:$0xff] %v1184
        %v1189 = vld [vmem:[#allocation3 + $0x4] sm:$0xff]
        %v1190 = vld [vmem:[#allocation3 + $0xc] sm:$0xf]
        %v1191 = vld [vmem:[#allocation3 + $0x14] sm:$0xff]
        %v1192 = vld [vmem:[#allocation3 + $0x1c] sm:$0xf]
        %v1193 = vunpack.c.l.bf16 %v1189
        %v1194 = vunpack.c.h.bf16 %v1189
        %v1195 = vunpack.c.l.bf16 %v1190
        %v1196 = vunpack.c.l.bf16 %v1191
        %v1197 = vunpack.c.h.bf16 %v1191
        %v1198 = vunpack.c.l.bf16 %v1192
        %v1199 = vmul.f32 %v1193, %v653
        %v1200 = vmul.f32 %v1194, %v657
        %v1201 = vmul.f32 %v1195, %v655
        %v1202 = vmul.f32 %v1196, %v653
        %v1203 = vmul.f32 %v1197, %v657
        %v1204 = vmul.f32 %v1198, %v655
        %v1205 = vpack.c.bf16 %v1200, %v1199
        %v1206 = vpack.c.bf16 %v1201, %v1201
        %v1207 = vpack.c.bf16 %v1203, %v1202
        %v1208 = vpack.c.bf16 %v1204, %v1204
        %1213 = vrot.lane.b32.xlu0 %v1205, 111
        %v1214 = vpop.permute.xlu0 %1213
        %1215 = vrot.lane.b32.xlu0 %v1206, 111
        %v1216 = vpop.permute.xlu0 %1215
        %1217 = vrot.lane.b32.xlu0 %v1207, 111
        %v1218 = vpop.permute.xlu0 %1217
        %1219 = vrot.lane.b32.xlu0 %v1208, 111
        %v1220 = vpop.permute.xlu0 %1219
        %v1221 = vrot.slane %v1214, 4
        %v1222 = vrot.slane %v1216, 4
        %v1223 = vrot.slane %v1218, 4
        %v1224 = vrot.slane %v1220, 4
        %v1225 = vsel %vm350, %v1221, %v1222
        %v1226 = vsel %vm688, %v1214, %v1225
        %v1227 = vsel %vm350, %v1223, %v1224
        %v1228 = vsel %vm688, %v1218, %v1227
        %1231 = vst [vmem:[#allocation4 + $0x80] sm:$0xff] %v1226
        %1232 = vst [vmem:[#allocation4 + $0x88] sm:$0xff] %v1228
        %v1233 = vld [vmem:[#allocation8] sm:$0xff]
        %v1234 = vld [vmem:[#allocation8 + $0x8] sm:$0xff]
        %v1235 = vld [vmem:[#allocation4] sm:$0xff]
        %v1236 = vld [vmem:[#allocation4 + $0x8] sm:$0xff]
        %v1237 = vld [vmem:[#allocation4 + $0x10] sm:$0xff]
        %v1238 = vld [vmem:[#allocation4 + $0x18] sm:$0xff]
        %v1239 = vld [vmem:[#allocation4 + $0x20] sm:$0xff]
        %v1240 = vld [vmem:[#allocation4 + $0x28] sm:$0xff]
        %v1241 = vld [vmem:[#allocation4 + $0x30] sm:$0xff]
        %v1242 = vld [vmem:[#allocation4 + $0x38] sm:$0xff]
        %v1243 = vld [vmem:[#allocation4 + $0x40] sm:$0xff]
        %v1244 = vld [vmem:[#allocation4 + $0x48] sm:$0xff]
        %v1245 = vld [vmem:[#allocation4 + $0x50] sm:$0xff]
        %v1246 = vld [vmem:[#allocation4 + $0x58] sm:$0xff]
        %v1247 = vld [vmem:[#allocation4 + $0x60] sm:$0xff]
        %v1248 = vld [vmem:[#allocation4 + $0x68] sm:$0xff]
        %v1249 = vld [vmem:[#allocation4 + $0x70] sm:$0xff]
        %v1250 = vld [vmem:[#allocation4 + $0x78] sm:$0xff]
        %v1251 = vld [vmem:[#allocation4 + $0x80] sm:$0xff]
        %v1252 = vld [vmem:[#allocation4 + $0x88] sm:$0xff]
        %v1255 = vunpack.c.l.b16 %v1233
        %v1256 = vunpack.c.h.b16 %v1233
        %v1257 = vunpack.c.l.b16 %v1234
        %v1258 = vunpack.c.h.b16 %v1234
        %v1259 = vpack.c.b16 %v1257, %v1255
        %v1260 = vpack.c.b16 %v1258, %v1256
        %v1280 = vunpack.c.l.b16 %v1235
        %v1281 = vunpack.c.h.b16 %v1235
        %v1282 = vunpack.c.l.b16 %v1236
        %v1283 = vunpack.c.h.b16 %v1236
        %v1284 = vunpack.c.l.b16 %v1237
        %v1285 = vunpack.c.h.b16 %v1237
        %v1286 = vunpack.c.l.b16 %v1238
        %v1287 = vunpack.c.h.b16 %v1238
        %v1288 = vunpack.c.l.b16 %v1239
        %v1289 = vunpack.c.h.b16 %v1239
        %v1290 = vunpack.c.l.b16 %v1240
        %v1291 = vunpack.c.h.b16 %v1240
        %v1292 = vunpack.c.l.b16 %v1241
        %v1293 = vunpack.c.h.b16 %v1241
        %v1294 = vunpack.c.l.b16 %v1242
        %v1295 = vunpack.c.h.b16 %v1242
        %v1296 = vunpack.c.l.b16 %v1243
        %v1297 = vunpack.c.h.b16 %v1243
        %v1298 = vunpack.c.l.b16 %v1244
        %v1299 = vunpack.c.h.b16 %v1244
        %v1300 = vunpack.c.l.b16 %v1245
        %v1301 = vunpack.c.h.b16 %v1245
        %v1302 = vunpack.c.l.b16 %v1246
        %v1303 = vunpack.c.h.b16 %v1246
        %v1304 = vunpack.c.l.b16 %v1247
        %v1305 = vunpack.c.h.b16 %v1247
        %v1306 = vunpack.c.l.b16 %v1248
        %v1307 = vunpack.c.h.b16 %v1248
        %v1308 = vunpack.c.l.b16 %v1249
        %v1309 = vunpack.c.h.b16 %v1249
        %v1310 = vunpack.c.l.b16 %v1250
        %v1311 = vunpack.c.h.b16 %v1250
        %v1312 = vunpack.c.l.b16 %v1251
        %v1313 = vunpack.c.h.b16 %v1251
        %v1314 = vunpack.c.l.b16 %v1252
        %v1315 = vunpack.c.h.b16 %v1252
        %v1316 = vpack.c.b16 %v1282, %v1280
        %v1317 = vpack.c.b16 %v1283, %v1281
        %v1318 = vpack.c.b16 %v1286, %v1284
        %v1319 = vpack.c.b16 %v1287, %v1285
        %v1320 = vpack.c.b16 %v1290, %v1288
        %v1321 = vpack.c.b16 %v1291, %v1289
        %v1322 = vpack.c.b16 %v1294, %v1292
        %v1323 = vpack.c.b16 %v1295, %v1293
        %v1324 = vpack.c.b16 %v1298, %v1296
        %v1325 = vpack.c.b16 %v1299, %v1297
        %v1326 = vpack.c.b16 %v1302, %v1300
        %v1327 = vpack.c.b16 %v1303, %v1301
        %v1328 = vpack.c.b16 %v1306, %v1304
        %v1329 = vpack.c.b16 %v1307, %v1305
        %v1330 = vpack.c.b16 %v1310, %v1308
        %v1331 = vpack.c.b16 %v1311, %v1309
        %v1332 = vpack.c.b16 %v1314, %v1312
        %v1333 = vpack.c.b16 %v1315, %v1313
        %v1353 = vsel %vm815, %v1260, 0
        %1355 = vmatpush.bf16.msra.mxu0 %v1330
        %1356 = vmatpush.bf16.msra.mxu0 %v1328
        %1357 = vmatpush.bf16.msra.mxu0 %v1326
        %1358 = vmatpush.bf16.msra.mxu0 %v1324
        %1359 = vmatpush.bf16.msra.mxu0 %v1322
        %1360 = vmatpush.bf16.msra.mxu0 %v1320
        %1361 = vmatpush.bf16.msra.mxu0 %v1318
        %1362 = vmatpush.bf16.msra.mxu0 %v1316
        %1363 = vmatmul.bf16.gmra.mxu0 %v1259
        %v1364 = vpop.f32.mrf.mxu0
        %v1365 = vadd.f32 0.0, %v1364
        %v1366 = vpop.f32.mrf.mxu0
        %v1367 = vadd.f32 0.0, %v1366
        %1368 = vdwg.mxu0
        %1369 = vmatpush.bf16.msra.mxu0 0
        %1370 = vmatpush.bf16.msra.mxu0 0
        %1371 = vmatpush.bf16.msra.mxu0 0
        %1372 = vmatpush.bf16.msra.mxu0 0
        %1373 = vmatpush.bf16.msra.mxu0 0
        %1374 = vmatpush.bf16.msra.mxu0 0
        %1375 = vmatpush.bf16.msra.mxu0 0
        %1376 = vmatpush.bf16.msra.mxu0 %v1332
        %1377 = vmatmul.bf16.gmra.mxu0 %v1353
        %v1378 = vpop.f32.mrf.mxu0
        %v1379 = vadd.f32 %v1365, %v1378
        %v1380 = vpop.f32.mrf.mxu0
        %v1381 = vadd.f32 %v1367, %v1380
        %1382 = vdwg.mxu0
        %1383 = vmatpush.bf16.msra.mxu0 %v1331
        %1384 = vmatpush.bf16.msra.mxu0 %v1329
        %1385 = vmatpush.bf16.msra.mxu0 %v1327
        %1386 = vmatpush.bf16.msra.mxu0 %v1325
        %1387 = vmatpush.bf16.msra.mxu0 %v1323
        %1388 = vmatpush.bf16.msra.mxu0 %v1321
        %1389 = vmatpush.bf16.msra.mxu0 %v1319
        %1390 = vmatpush.bf16.msra.mxu0 %v1317
        %1391 = vmatmul.bf16.gmra.mxu0 %v1259
        %v1392 = vpop.f32.mrf.mxu0
        %v1393 = vadd.f32 0.0, %v1392
        %v1394 = vpop.f32.mrf.mxu0
        %v1395 = vadd.f32 0.0, %v1394
        %1396 = vdwg.mxu0
        %1397 = vmatpush.bf16.msra.mxu0 0
        %1398 = vmatpush.bf16.msra.mxu0 0
        %1399 = vmatpush.bf16.msra.mxu0 0
        %1400 = vmatpush.bf16.msra.mxu0 0
        %1401 = vmatpush.bf16.msra.mxu0 0
        %1402 = vmatpush.bf16.msra.mxu0 0
        %1403 = vmatpush.bf16.msra.mxu0 0
        %1404 = vmatpush.bf16.msra.mxu0 %v1333
        %1405 = vmatmul.bf16.gmra.mxu0 %v1353
        %v1406 = vpop.f32.mrf.mxu0
        %v1407 = vadd.f32 %v1393, %v1406
        %v1408 = vpop.f32.mrf.mxu0
        %v1409 = vadd.f32 %v1395, %v1408
        %1410 = vdwg.mxu0
        %1411 = vset.pattern.permute.xlu0 2
        %1412 = vperm.xlu0 %1411, %v299
        %v1413 = vpop.permute.xlu0 %1412
        %1415 = vset.pattern.permute.xlu0 2
        %1416 = vperm.xlu0 %1415, %v300
        %v1417 = vpop.permute.xlu0 %1416
        %v1419 = vmul.f32 %v1379, %v1413
        %v1420 = vmul.f32 %v1407, %v1413
        %v1421 = vmul.f32 %v1381, %v1417
        %v1422 = vmul.f32 %v1409, %v1417
        %1423 = vset.pattern.permute.xlu0 3
        %1424 = vperm.xlu0 %1423, %v299
        %v1425 = vpop.permute.xlu0 %1424
        %1427 = vset.pattern.permute.xlu0 3
        %1428 = vperm.xlu0 %1427, %v300
        %v1429 = vpop.permute.xlu0 %1428
        %v1431 = vadd.f32 %v1419, %v1425
        %v1432 = vadd.f32 %v1420, %v1425
        %v1433 = vadd.f32 %v1421, %v1429
        %v1434 = vadd.f32 %v1422, %v1429
        %v1435 = vunpack.c.l.bf16 %v271
        %v1436 = vunpack.c.h.bf16 %v271
        %v1437 = vunpack.c.l.bf16 %v272
        %v1438 = vunpack.c.h.bf16 %v272
        %v1439 = vadd.f32 %v1431, %v1435
        %v1440 = vadd.f32 %v1432, %v1436
        %v1441 = vadd.f32 %v1433, %v1437
        %v1442 = vadd.f32 %v1434, %v1438
        %v1443 = vmax.f32 %v1439, 0.0
        %v1444 = vmax.f32 %v1440, 0.0
        %v1445 = vmax.f32 %v1441, 0.0
        %v1446 = vmax.f32 %v1442, 0.0
        %v1447 = vpack.c.bf16 %v1444, %v1443
        %v1448 = vpack.c.bf16 %v1446, %v1445
        %1449 = vst [vmem:[%s261] sm:$0xff] %v1447
        %1450 = vst [vmem:[%s261 + $0x8] sm:$0xff] %v1448
        %s1451 = sand.u32 %s141, 1
        %s1452 = scalar_lea.sflag [#allocation7], %s1451
        %s1453 = sand.u32 %s141, 1
        %s1454 = smul.addr %s1453, 16
        %s1455 = scalar_lea.vmem [#allocation10], %s1454
        // Predicated region
        $region49: #{tpu_custom_call.1} parent=39 // pred_check
          %p1456 = pneg %p151
        $region50: #{tpu_custom_call.1} parent=39 // pred_check_branch
          %1458 = sbr.rel (%p1456) target = $region52
        $region51: #{tpu_custom_call.1} parent=39 // pred_region
          %1460 = vsyncadd %s1452, 0
          %s1461 = smul.addr %s23, 4
          %s1462 = smul.addr %s1461, 4
          %s1463 = scalar_lea.hbm %s5, %s1462
          %s1464 = sshll.u32 %s1455, 4
          %s1465 = int_to_ptr.vmem [resolvable:$true] %s1464
          %s1466 = sshll.u32 %s1463, 4
          %s1467 = int_to_ptr.hbm [resolvable:$true] %s1466
          %1472 = dma.vmem_to_hbm [thread:$0]  %s1465, 256, %s1467, %s1452, 128, 128, 8
        $region52: #{tpu_custom_call.1} parent=39 // pred_fallthru
          _
      $region40: #{tpu_custom_call.1} parent=5 // pred_fallthru
        _
      %p1473 = scmp.le.s32.totalorder 2, %s18
      // Predicated region
      $region53: #{tpu_custom_call.1} parent=5 // pred_check
        %p1474 = pneg %p1473
      $region54: #{tpu_custom_call.1} parent=5 // pred_check_branch
        %1476 = sbr.rel (%p1474) target = $region56
      $region55: #{tpu_custom_call.1} parent=5 // pred_region
        %s1477 = ssub.s32 %s18, 2
        // Predicated region
        $region57: #{tpu_custom_call.1} parent=55 // pred_check
          %p1478 = pneg %p157
        $region58: #{tpu_custom_call.1} parent=55 // pred_check_branch
          %1480 = sbr.rel (%p1478) target = $region60
        $region59: #{tpu_custom_call.1} parent=55 // pred_region
          %s1481 = sand.u32 %s142, 1
          %s1482 = scalar_lea.sflag [#allocation7], %s1481
          %s1483 = sand.u32 %s142, 1
          %s1484 = smul.addr %s1483, 16
          %s1485 = scalar_lea.vmem [#allocation10], %s1484
          %1487 = dma.done %s1482, 256
        $region60: #{tpu_custom_call.1} parent=55 // pred_fallthru
          _
      $region56: #{tpu_custom_call.1} parent=5 // pred_fallthru
        _
    $region6: #{tpu_custom_call.1} parent=1 // loop_footer
      %s22 = sadd.s32 1, %s18
    $region7: #{tpu_custom_call.1} parent=1 // loop_footer_branch
      %17 = sbr.rel target = $region3
    $region8: #{tpu_custom_call.1} parent=1 // loop_exit
      _
    %1488 = vsyncpa [#allocation6], 1
    %s1489 = scalar_lea.sflag [#allocation6], 1
    %1490 = vsyncpa %s1489, 1
    %1491 = vsyncpa [#allocation9], 1
    %1492 = vsyncpa [#allocation7], 1
    %s1493 = scalar_lea.sflag [#allocation7], 1
    %1494 = vsyncpa %s1493, 1

</llo_original>
